<compile_context>
chip_gen: v7x
topology: tpu7x:2x2x1
jax: 0.10.0
libtpu: 0.0.40
codegen_flags: <defaults>
</compile_context>

<pallas_src>
import functools

import jax
import jax.numpy as jnp
from jax.experimental import pallas as pl
from jax.experimental.pallas import tpu as pltpu


# ------------------------------ fused kernel --------------------------------
def mhsa_kernel(x_ref, mask_ref, wq_ref, bq_ref, wk_ref, bk_ref, wv_ref, bv_ref,
                o_ref, *, n_heads, head_dim):
    # x_ref:    (1, S, F)   one batch element
    # mask_ref: (1, 1, S)   1.0 = keep, 0.0 = masked
    # w*_ref:   (F, D), b*_ref: (1, D)
    # o_ref:    (1, S, D)
    x = x_ref[0].astype(jnp.float32)                      # (S, F)
    m = mask_ref[0].astype(jnp.float32)                   # (1, S)
    neg = 10000.0 * (1.0 - m)                             # (1, S) additive penalty

    # Q/K/V projections on the MXU, f32 accumulation.  Fold the 1/sqrt(W)
    # attention scale into Q once (cheaper than scaling every (S,S) score tile).
    scale = 1.0 / (float(head_dim) ** 0.5)
    q = (jnp.dot(x, wq_ref[...], preferred_element_type=jnp.float32)
         + bq_ref[...]) * scale                           # (S, D)
    k = jnp.dot(x, wk_ref[...], preferred_element_type=jnp.float32) + bk_ref[...]
    v = jnp.dot(x, wv_ref[...], preferred_element_type=jnp.float32) + bv_ref[...]

    # Static per-head loop (n_heads is small); each head is one MXU matmul pair.
    outs = []
    for h in range(n_heads):
        lo = h * head_dim
        hi = lo + head_dim
        qh = q[:, lo:hi]                                  # (S, W)
        kh = k[:, lo:hi]                                  # (S, W)
        vh = v[:, lo:hi]                                  # (S, W)

        s = jnp.dot(qh, kh.T, preferred_element_type=jnp.float32)  # (S, S)
        s = s - neg                                       # broadcast over rows
        s = s - jnp.max(s, axis=-1, keepdims=True)        # stable softmax
        p = jnp.exp(s)
        p = p / jnp.sum(p, axis=-1, keepdims=True)

        outs.append(jnp.dot(p, vh, preferred_element_type=jnp.float32))

    # Merge heads and do ONE lane-dense store of the full (S, D) slab.
    o_ref[0] = jnp.concatenate(outs, axis=-1).astype(o_ref.dtype)


def mhsa_forward(x, mask, params, n_heads):
    """x: (B, S, F) float32; mask: (B, S) in {0,1}; returns (B, S, D)."""
    B, S, F = x.shape
    D = params["wq"].shape[1]
    assert D % n_heads == 0
    head_dim = D // n_heads

    mask3 = mask.reshape(B, 1, S).astype(jnp.float32)     # block-friendly layout

    kern = functools.partial(mhsa_kernel, n_heads=n_heads, head_dim=head_dim)
    const = lambda b: (0, 0)                              # replicated weights
    out = pl.pallas_call(
        kern,
        out_shape=jax.ShapeDtypeStruct((B, S, D), jnp.float32),
        grid=(B,),
        in_specs=[
            pl.BlockSpec((1, S, F), lambda b: (b, 0, 0)),   # x
            pl.BlockSpec((1, 1, S), lambda b: (b, 0, 0)),   # mask
            pl.BlockSpec((F, D), const),                    # wq
            pl.BlockSpec((1, D), const),                    # bq
            pl.BlockSpec((F, D), const),                    # wk
            pl.BlockSpec((1, D), const),                    # bk
            pl.BlockSpec((F, D), const),                    # wv
            pl.BlockSpec((1, D), const),                    # bv
        ],
        out_specs=pl.BlockSpec((1, S, D), lambda b: (b, 0, 0)),
        compiler_params=pltpu.CompilerParams(
            dimension_semantics=("parallel",)),             # 2 TCs on v7x
    )(x, mask3, params["wq"], params["bq"], params["wk"], params["bk"],
      params["wv"], params["bv"])
    return out


# ------------------------------ pure-JAX reference ---------------------------
def reference(x, mask, params, n_heads):
    B, S, F = x.shape
    D = params["wq"].shape[1]
    W = D // n_heads

    q = x @ params["wq"] + params["bq"]
    k = x @ params["wk"] + params["bk"]
    v = x @ params["wv"] + params["bv"]

    def split(t):  # (B, S, D) -> (B, H, S, W)
        return t.reshape(B, S, n_heads, W).transpose(0, 2, 1, 3)

    q, k, v = split(q), split(k), split(v)
    scores = (q @ k.transpose(0, 1, 3, 2)) / jnp.sqrt(jnp.float32(W))
    m = mask[:, None, None, :].astype(jnp.float32)
    scores = scores - 10000.0 * (1.0 - m)
    attn = jax.nn.softmax(scores, axis=-1)
    h = (attn @ v).transpose(0, 2, 1, 3).reshape(B, S, D)
    return h


# ----------------------------------- main ------------------------------------
if __name__ == "__main__":
    B, S, feat_dim, dim, n_heads = 2, 8, 32, 32, 4

    key = jax.random.PRNGKey(0)
    kx, km, k1, k2, k3, k4, k5, k6 = jax.random.split(key, 8)

    x = jax.random.normal(kx, (B, S, feat_dim), jnp.float32)
    # deterministic 0/1 mask with some masked positions
    mask = (jax.random.uniform(km, (B, S)) > 0.25).astype(jnp.float32)
    # make sure every row keeps at least its first token
    mask = mask.at[:, 0].set(1.0)

    # nn.Linear weights stored already-transposed: y = x @ W + b
    params = {
        "wq": 0.1 * jax.random.normal(k1, (feat_dim, dim), jnp.float32),
        "bq": 0.1 * jax.random.normal(k2, (1, dim), jnp.float32),
        "wk": 0.1 * jax.random.normal(k3, (feat_dim, dim), jnp.float32),
        "bk": 0.1 * jax.random.normal(k4, (1, dim), jnp.float32),
        "wv": 0.1 * jax.random.normal(k5, (feat_dim, dim), jnp.float32),
        "bv": 0.1 * jax.random.normal(k6, (1, dim), jnp.float32),
    }

    out = jax.block_until_ready(mhsa_forward(x, mask, params, n_heads))
    ref = jax.block_until_ready(reference(x, mask, params, n_heads))

    assert out.shape == (B, S, dim), out.shape
    assert jnp.allclose(out, ref, rtol=1e-4, atol=1e-4), (
        float(jnp.max(jnp.abs(out - ref))))
    print("KERNEL_OK")
</pallas_src>

<mosaic_0001>
module attributes {stable_mosaic.version = 11 : i64} {
  func.func @mhsa_kernel(%arg0: i32, %arg1: memref<1x8x32xf32, #tpu.memory_space<vmem>>, %arg2: memref<1x1x8xf32, #tpu.memory_space<vmem>>, %arg3: memref<32x32xf32, #tpu.memory_space<vmem>>, %arg4: memref<1x32xf32, #tpu.memory_space<vmem>>, %arg5: memref<32x32xf32, #tpu.memory_space<vmem>>, %arg6: memref<1x32xf32, #tpu.memory_space<vmem>>, %arg7: memref<32x32xf32, #tpu.memory_space<vmem>>, %arg8: memref<1x32xf32, #tpu.memory_space<vmem>>, %arg9: memref<1x8x32xf32, #tpu.memory_space<vmem>>) attributes {dimension_semantics = [#tpu.dimension_semantics<parallel>], iteration_bounds = array<i64: 2>, scalar_prefetch = 0 : i64, scratch_operands = 0 : i64, tpu.core_type = #tpu.core_type<tc>, window_params = [{transform_indices = @transform_0, window_bounds = array<i64: 1, 8, 32>}, {transform_indices = @transform_1, window_bounds = array<i64: 1, 1, 8>}, {pipeline_mode = #tpu.pipeline_mode<synchronous>, transform_indices = @transform_2, window_bounds = array<i64: 32, 32>}, {pipeline_mode = #tpu.pipeline_mode<synchronous>, transform_indices = @transform_3, window_bounds = array<i64: 1, 32>}, {pipeline_mode = #tpu.pipeline_mode<synchronous>, transform_indices = @transform_4, window_bounds = array<i64: 32, 32>}, {pipeline_mode = #tpu.pipeline_mode<synchronous>, transform_indices = @transform_5, window_bounds = array<i64: 1, 32>}, {pipeline_mode = #tpu.pipeline_mode<synchronous>, transform_indices = @transform_6, window_bounds = array<i64: 32, 32>}, {pipeline_mode = #tpu.pipeline_mode<synchronous>, transform_indices = @transform_7, window_bounds = array<i64: 1, 32>}, {transform_indices = @transform_8, window_bounds = array<i64: 1, 8, 32>}]} {
    %c0 = arith.constant 0 : index
    %c0_0 = arith.constant 0 : index
    %c0_1 = arith.constant 0 : index
    %0 = vector.load %arg1[%c0, %c0_0, %c0_1] : memref<1x8x32xf32, #tpu.memory_space<vmem>>, vector<1x8x32xf32>
    %1 = vector.shape_cast %0 : vector<1x8x32xf32> to vector<8x32xf32>
    %c0_2 = arith.constant 0 : index
    %c0_3 = arith.constant 0 : index
    %c0_4 = arith.constant 0 : index
    %2 = vector.load %arg2[%c0_2, %c0_3, %c0_4] : memref<1x1x8xf32, #tpu.memory_space<vmem>>, vector<1x1x8xf32>
    %3 = vector.shape_cast %2 : vector<1x1x8xf32> to vector<1x8xf32>
    %cst = arith.constant 1.000000e+00 : f32
    %4 = vector.broadcast %cst : f32 to vector<1x8xf32>
    %5 = arith.subf %4, %3 : vector<1x8xf32>
    %cst_5 = arith.constant 1.000000e+04 : f32
    %6 = vector.broadcast %cst_5 : f32 to vector<1x8xf32>
    %7 = arith.mulf %6, %5 : vector<1x8xf32>
    %c0_6 = arith.constant 0 : index
    %c0_7 = arith.constant 0 : index
    %8 = vector.load %arg3[%c0_6, %c0_7] : memref<32x32xf32, #tpu.memory_space<vmem>>, vector<32x32xf32>
    %cst_8 = arith.constant dense<0.000000e+00> : vector<8x32xf32>
    %9 = tpu.matmul %1, %8, %cst_8 {dimension_numbers = #tpu.dot_dimension_numbers<[1], [0], [0], [1], [0, 0, 1, 1], [], []>} : vector<8x32xf32>, vector<32x32xf32>, vector<8x32xf32> -> vector<8x32xf32>
    %c0_9 = arith.constant 0 : index
    %c0_10 = arith.constant 0 : index
    %10 = vector.load %arg4[%c0_9, %c0_10] : memref<1x32xf32, #tpu.memory_space<vmem>>, vector<1x32xf32>
    %11 = vector.broadcast %10 : vector<1x32xf32> to vector<8x32xf32>
    %12 = arith.addf %9, %11 : vector<8x32xf32>
    %cst_11 = arith.constant 0.353553385 : f32
    %13 = vector.broadcast %cst_11 : f32 to vector<8x32xf32>
    %14 = arith.mulf %12, %13 : vector<8x32xf32>
    %c0_12 = arith.constant 0 : index
    %c0_13 = arith.constant 0 : index
    %15 = vector.load %arg5[%c0_12, %c0_13] : memref<32x32xf32, #tpu.memory_space<vmem>>, vector<32x32xf32>
    %cst_14 = arith.constant dense<0.000000e+00> : vector<8x32xf32>
    %16 = tpu.matmul %1, %15, %cst_14 {dimension_numbers = #tpu.dot_dimension_numbers<[1], [0], [0], [1], [0, 0, 1, 1], [], []>} : vector<8x32xf32>, vector<32x32xf32>, vector<8x32xf32> -> vector<8x32xf32>
    %c0_15 = arith.constant 0 : index
    %c0_16 = arith.constant 0 : index
    %17 = vector.load %arg6[%c0_15, %c0_16] : memref<1x32xf32, #tpu.memory_space<vmem>>, vector<1x32xf32>
    %18 = vector.broadcast %17 : vector<1x32xf32> to vector<8x32xf32>
    %19 = arith.addf %16, %18 : vector<8x32xf32>
    %c0_17 = arith.constant 0 : index
    %c0_18 = arith.constant 0 : index
    %20 = vector.load %arg7[%c0_17, %c0_18] : memref<32x32xf32, #tpu.memory_space<vmem>>, vector<32x32xf32>
    %cst_19 = arith.constant dense<0.000000e+00> : vector<8x32xf32>
    %21 = tpu.matmul %1, %20, %cst_19 {dimension_numbers = #tpu.dot_dimension_numbers<[1], [0], [0], [1], [0, 0, 1, 1], [], []>} : vector<8x32xf32>, vector<32x32xf32>, vector<8x32xf32> -> vector<8x32xf32>
    %c0_20 = arith.constant 0 : index
    %c0_21 = arith.constant 0 : index
    %22 = vector.load %arg8[%c0_20, %c0_21] : memref<1x32xf32, #tpu.memory_space<vmem>>, vector<1x32xf32>
    %23 = vector.broadcast %22 : vector<1x32xf32> to vector<8x32xf32>
    %24 = arith.addf %21, %23 : vector<8x32xf32>
    %25 = vector.extract_strided_slice %14 {offsets = [0, 0], sizes = [8, 8], strides = [1, 1]} : vector<8x32xf32> to vector<8x8xf32>
    %26 = vector.extract_strided_slice %19 {offsets = [0, 0], sizes = [8, 8], strides = [1, 1]} : vector<8x32xf32> to vector<8x8xf32>
    %27 = vector.extract_strided_slice %24 {offsets = [0, 0], sizes = [8, 8], strides = [1, 1]} : vector<8x32xf32> to vector<8x8xf32>
    %28 = tpu.transpose %26, [1, 0] : vector<8x8xf32> -> vector<8x8xf32>
    %cst_22 = arith.constant dense<0.000000e+00> : vector<8x8xf32>
    %29 = tpu.matmul %25, %28, %cst_22 {dimension_numbers = #tpu.dot_dimension_numbers<[1], [0], [0], [1], [0, 0, 1, 1], [], []>} : vector<8x8xf32>, vector<8x8xf32>, vector<8x8xf32> -> vector<8x8xf32>
    %30 = vector.broadcast %7 : vector<1x8xf32> to vector<8x8xf32>
    %31 = arith.subf %29, %30 : vector<8x8xf32>
    %cst_23 = arith.constant dense<0xFF800000> : vector<8xf32>
    %32 = vector.multi_reduction <maximumf>, %31, %cst_23 [1] : vector<8x8xf32> to vector<8xf32>
    %33 = vector.shape_cast %32 : vector<8xf32> to vector<8x1xf32>
    %34 = vector.broadcast %33 : vector<8x1xf32> to vector<8x8xf32>
    %35 = arith.subf %31, %34 : vector<8x8xf32>
    %36 = math.exp %35 : vector<8x8xf32>
    %cst_24 = arith.constant dense<0.000000e+00> : vector<8xf32>
    %37 = vector.multi_reduction <add>, %36, %cst_24 [1] : vector<8x8xf32> to vector<8xf32>
    %38 = vector.shape_cast %37 : vector<8xf32> to vector<8x1xf32>
    %39 = vector.broadcast %38 : vector<8x1xf32> to vector<8x8xf32>
    %40 = arith.divf %36, %39 : vector<8x8xf32>
    %cst_25 = arith.constant dense<0.000000e+00> : vector<8x8xf32>
    %41 = tpu.matmul %40, %27, %cst_25 {dimension_numbers = #tpu.dot_dimension_numbers<[1], [0], [0], [1], [0, 0, 1, 1], [], []>} : vector<8x8xf32>, vector<8x8xf32>, vector<8x8xf32> -> vector<8x8xf32>
    %42 = vector.extract_strided_slice %14 {offsets = [0, 8], sizes = [8, 8], strides = [1, 1]} : vector<8x32xf32> to vector<8x8xf32>
    %43 = vector.extract_strided_slice %19 {offsets = [0, 8], sizes = [8, 8], strides = [1, 1]} : vector<8x32xf32> to vector<8x8xf32>
    %44 = vector.extract_strided_slice %24 {offsets = [0, 8], sizes = [8, 8], strides = [1, 1]} : vector<8x32xf32> to vector<8x8xf32>
    %45 = tpu.transpose %43, [1, 0] : vector<8x8xf32> -> vector<8x8xf32>
    %cst_26 = arith.constant dense<0.000000e+00> : vector<8x8xf32>
    %46 = tpu.matmul %42, %45, %cst_26 {dimension_numbers = #tpu.dot_dimension_numbers<[1], [0], [0], [1], [0, 0, 1, 1], [], []>} : vector<8x8xf32>, vector<8x8xf32>, vector<8x8xf32> -> vector<8x8xf32>
    %47 = vector.broadcast %7 : vector<1x8xf32> to vector<8x8xf32>
    %48 = arith.subf %46, %47 : vector<8x8xf32>
    %cst_27 = arith.constant dense<0xFF800000> : vector<8xf32>
    %49 = vector.multi_reduction <maximumf>, %48, %cst_27 [1] : vector<8x8xf32> to vector<8xf32>
    %50 = vector.shape_cast %49 : vector<8xf32> to vector<8x1xf32>
    %51 = vector.broadcast %50 : vector<8x1xf32> to vector<8x8xf32>
    %52 = arith.subf %48, %51 : vector<8x8xf32>
    %53 = math.exp %52 : vector<8x8xf32>
    %cst_28 = arith.constant dense<0.000000e+00> : vector<8xf32>
    %54 = vector.multi_reduction <add>, %53, %cst_28 [1] : vector<8x8xf32> to vector<8xf32>
    %55 = vector.shape_cast %54 : vector<8xf32> to vector<8x1xf32>
    %56 = vector.broadcast %55 : vector<8x1xf32> to vector<8x8xf32>
    %57 = arith.divf %53, %56 : vector<8x8xf32>
    %cst_29 = arith.constant dense<0.000000e+00> : vector<8x8xf32>
    %58 = tpu.matmul %57, %44, %cst_29 {dimension_numbers = #tpu.dot_dimension_numbers<[1], [0], [0], [1], [0, 0, 1, 1], [], []>} : vector<8x8xf32>, vector<8x8xf32>, vector<8x8xf32> -> vector<8x8xf32>
    %59 = vector.extract_strided_slice %14 {offsets = [0, 16], sizes = [8, 8], strides = [1, 1]} : vector<8x32xf32> to vector<8x8xf32>
    %60 = vector.extract_strided_slice %19 {offsets = [0, 16], sizes = [8, 8], strides = [1, 1]} : vector<8x32xf32> to vector<8x8xf32>
    %61 = vector.extract_strided_slice %24 {offsets = [0, 16], sizes = [8, 8], strides = [1, 1]} : vector<8x32xf32> to vector<8x8xf32>
    %62 = tpu.transpose %60, [1, 0] : vector<8x8xf32> -> vector<8x8xf32>
    %cst_30 = arith.constant dense<0.000000e+00> : vector<8x8xf32>
    %63 = tpu.matmul %59, %62, %cst_30 {dimension_numbers = #tpu.dot_dimension_numbers<[1], [0], [0], [1], [0, 0, 1, 1], [], []>} : vector<8x8xf32>, vector<8x8xf32>, vector<8x8xf32> -> vector<8x8xf32>
    %64 = vector.broadcast %7 : vector<1x8xf32> to vector<8x8xf32>
    %65 = arith.subf %63, %64 : vector<8x8xf32>
    %cst_31 = arith.constant dense<0xFF800000> : vector<8xf32>
    %66 = vector.multi_reduction <maximumf>, %65, %cst_31 [1] : vector<8x8xf32> to vector<8xf32>
    %67 = vector.shape_cast %66 : vector<8xf32> to vector<8x1xf32>
    %68 = vector.broadcast %67 : vector<8x1xf32> to vector<8x8xf32>
    %69 = arith.subf %65, %68 : vector<8x8xf32>
    %70 = math.exp %69 : vector<8x8xf32>
    %cst_32 = arith.constant dense<0.000000e+00> : vector<8xf32>
    %71 = vector.multi_reduction <add>, %70, %cst_32 [1] : vector<8x8xf32> to vector<8xf32>
    %72 = vector.shape_cast %71 : vector<8xf32> to vector<8x1xf32>
    %73 = vector.broadcast %72 : vector<8x1xf32> to vector<8x8xf32>
    %74 = arith.divf %70, %73 : vector<8x8xf32>
    %cst_33 = arith.constant dense<0.000000e+00> : vector<8x8xf32>
    %75 = tpu.matmul %74, %61, %cst_33 {dimension_numbers = #tpu.dot_dimension_numbers<[1], [0], [0], [1], [0, 0, 1, 1], [], []>} : vector<8x8xf32>, vector<8x8xf32>, vector<8x8xf32> -> vector<8x8xf32>
    %76 = vector.extract_strided_slice %14 {offsets = [0, 24], sizes = [8, 8], strides = [1, 1]} : vector<8x32xf32> to vector<8x8xf32>
    %77 = vector.extract_strided_slice %19 {offsets = [0, 24], sizes = [8, 8], strides = [1, 1]} : vector<8x32xf32> to vector<8x8xf32>
    %78 = vector.extract_strided_slice %24 {offsets = [0, 24], sizes = [8, 8], strides = [1, 1]} : vector<8x32xf32> to vector<8x8xf32>
    %79 = tpu.transpose %77, [1, 0] : vector<8x8xf32> -> vector<8x8xf32>
    %cst_34 = arith.constant dense<0.000000e+00> : vector<8x8xf32>
    %80 = tpu.matmul %76, %79, %cst_34 {dimension_numbers = #tpu.dot_dimension_numbers<[1], [0], [0], [1], [0, 0, 1, 1], [], []>} : vector<8x8xf32>, vector<8x8xf32>, vector<8x8xf32> -> vector<8x8xf32>
    %81 = vector.broadcast %7 : vector<1x8xf32> to vector<8x8xf32>
    %82 = arith.subf %80, %81 : vector<8x8xf32>
    %cst_35 = arith.constant dense<0xFF800000> : vector<8xf32>
    %83 = vector.multi_reduction <maximumf>, %82, %cst_35 [1] : vector<8x8xf32> to vector<8xf32>
    %84 = vector.shape_cast %83 : vector<8xf32> to vector<8x1xf32>
    %85 = vector.broadcast %84 : vector<8x1xf32> to vector<8x8xf32>
    %86 = arith.subf %82, %85 : vector<8x8xf32>
    %87 = math.exp %86 : vector<8x8xf32>
    %cst_36 = arith.constant dense<0.000000e+00> : vector<8xf32>
    %88 = vector.multi_reduction <add>, %87, %cst_36 [1] : vector<8x8xf32> to vector<8xf32>
    %89 = vector.shape_cast %88 : vector<8xf32> to vector<8x1xf32>
    %90 = vector.broadcast %89 : vector<8x1xf32> to vector<8x8xf32>
    %91 = arith.divf %87, %90 : vector<8x8xf32>
    %cst_37 = arith.constant dense<0.000000e+00> : vector<8x8xf32>
    %92 = tpu.matmul %91, %78, %cst_37 {dimension_numbers = #tpu.dot_dimension_numbers<[1], [0], [0], [1], [0, 0, 1, 1], [], []>} : vector<8x8xf32>, vector<8x8xf32>, vector<8x8xf32> -> vector<8x8xf32>
    %93 = tpu.concatenate %41, %58, %75, %92 in 1 : vector<8x8xf32>, vector<8x8xf32>, vector<8x8xf32>, vector<8x8xf32> -> vector<8x32xf32>
    %c0_38 = arith.constant 0 : index
    %c0_39 = arith.constant 0 : index
    %c0_40 = arith.constant 0 : index
    %94 = vector.load %arg9[%c0_38, %c0_39, %c0_40] : memref<1x8x32xf32, #tpu.memory_space<vmem>>, vector<1x8x32xf32>
    %95 = vector.shape_cast %94 : vector<1x8x32xf32> to vector<8x32xf32>
    %96 = vector.shape_cast %93 : vector<8x32xf32> to vector<1x8x32xf32>
    tpu.vector_store %arg9[%c0_38, %c0_39, %c0_40], %96 {strides = array<i32>} : memref<1x8x32xf32, #tpu.memory_space<vmem>>, vector<1x8x32xf32>,
    return
  }
  func.func @transform_0(%arg0: i32) -> (i32, i32, i32) {
    %c0_i32 = arith.constant 0 : i32
    %c0_i32_0 = arith.constant 0 : i32
    %c0_i32_1 = arith.constant 0 : i32
    return %arg0, %c0_i32, %c0_i32_0 : i32, i32, i32
  }
  func.func @transform_1(%arg0: i32) -> (i32, i32, i32) {
    %c0_i32 = arith.constant 0 : i32
    %c0_i32_0 = arith.constant 0 : i32
    %c0_i32_1 = arith.constant 0 : i32
    return %arg0, %c0_i32, %c0_i32_0 : i32, i32, i32
  }
  func.func @transform_2(%arg0: i32) -> (i32, i32) {
    %c0_i32 = arith.constant 0 : i32
    %c0_i32_0 = arith.constant 0 : i32
    %c0_i32_1 = arith.constant 0 : i32
    return %c0_i32, %c0_i32_0 : i32, i32
  }
  func.func @transform_3(%arg0: i32) -> (i32, i32) {
    %c0_i32 = arith.constant 0 : i32
    %c0_i32_0 = arith.constant 0 : i32
    %c0_i32_1 = arith.constant 0 : i32
    return %c0_i32, %c0_i32_0 : i32, i32
  }
  func.func @transform_4(%arg0: i32) -> (i32, i32) {
    %c0_i32 = arith.constant 0 : i32
    %c0_i32_0 = arith.constant 0 : i32
    %c0_i32_1 = arith.constant 0 : i32
    return %c0_i32, %c0_i32_0 : i32, i32
  }
  func.func @transform_5(%arg0: i32) -> (i32, i32) {
    %c0_i32 = arith.constant 0 : i32
    %c0_i32_0 = arith.constant 0 : i32
    %c0_i32_1 = arith.constant 0 : i32
    return %c0_i32, %c0_i32_0 : i32, i32
  }
  func.func @transform_6(%arg0: i32) -> (i32, i32) {
    %c0_i32 = arith.constant 0 : i32
    %c0_i32_0 = arith.constant 0 : i32
    %c0_i32_1 = arith.constant 0 : i32
    return %c0_i32, %c0_i32_0 : i32, i32
  }
  func.func @transform_7(%arg0: i32) -> (i32, i32) {
    %c0_i32 = arith.constant 0 : i32
    %c0_i32_0 = arith.constant 0 : i32
    %c0_i32_1 = arith.constant 0 : i32
    return %c0_i32, %c0_i32_0 : i32, i32
  }
  func.func @transform_8(%arg0: i32) -> (i32, i32, i32) {
    %c0_i32 = arith.constant 0 : i32
    %c0_i32_0 = arith.constant 0 : i32
    %c0_i32_1 = arith.constant 0 : i32
    return %arg0, %c0_i32, %c0_i32_0 : i32, i32, i32
  }
}

</mosaic_0001>

<llo_original>
// kernel: tpu_custom_call.1
$region0: #{tpu_custom_call.1}
  #allocation0 [shape = 'u32[]', space=smem, size = 0x4, offset = 0x4, fixed_abs, tag = 'smem constant byte address 0x4 - core index']
  #allocation1 [shape = 'u32[144,128]{1,0:T(1,128)}', space=vmem, size = 0x12000, scoped, tag = 'internal scratch']
  %s0 = inlined_call_operand.hbm [shape: f32[2,8,32], index: 0, kind: input, shape index: {}]
  %s1 = inlined_call_operand.vmem [shape: f32[2,1,8], index: 1, kind: input, shape index: {}]
  %s2 = inlined_call_operand.hbm [shape: f32[32,32], index: 2, kind: input, shape index: {}]
  %s3 = inlined_call_operand.vmem [shape: f32[1,32], index: 3, kind: input, shape index: {}]
  %s4 = inlined_call_operand.hbm [shape: f32[32,32], index: 4, kind: input, shape index: {}]
  %s5 = inlined_call_operand.vmem [shape: f32[1,32], index: 5, kind: input, shape index: {}]
  %s6 = inlined_call_operand.hbm [shape: f32[32,32], index: 6, kind: input, shape index: {}]
  %s7 = inlined_call_operand.vmem [shape: f32[1,32], index: 7, kind: input, shape index: {}]
  %s8 = inlined_call_operand.hbm [shape: f32[2,8,32], index: 8, kind: output, shape index: {}]
  %s9 = sld [smem:[#allocation0]]
  $region81: #{tpu_custom_call.1} parent=0
    _
  %s11 = ssub.s32 1, %s9
  %s12 = scalar_select 0, %s11, %s9
  $region1: #{tpu_custom_call.1} parent=0
    #allocation2 [shape = 'u8[8192]{0}', space=vmem, size = 0x2000, scoped, tag = 'input window, operand 0']
    #allocation3 [shape = 's32[2]{0}', space=sflag, size = 0x8, scoped, tag = 'scoped memory for tpu_custom_call.1']
    #allocation4 [shape = 's32[2]{0}', space=sflag, size = 0x8, scoped, tag = 'scoped memory for tpu_custom_call.1']
    #allocation5 [shape = 'u8[16384]{0}', space=vmem, size = 0x4000, scoped, tag = 'input window, operand 2, single buffered']
    #allocation6 [shape = 's32[1]{0}', space=sflag, size = 0x4, scoped, tag = 'scoped memory for tpu_custom_call.1']
    #allocation7 [shape = 'u8[16384]{0}', space=vmem, size = 0x4000, scoped, tag = 'input window, operand 4, single buffered']
    #allocation8 [shape = 'u8[16384]{0}', space=vmem, size = 0x4000, scoped, tag = 'input window, operand 6, single buffered']
    #allocation9 [shape = 's32[1]{0}', space=sflag, size = 0x4, scoped, tag = 'scoped memory for tpu_custom_call.1']
    #allocation10 [shape = 'u8[8192]{0}', space=vmem, size = 0x2000, scoped, tag = 'output window, operand 0']
    %13 = vsyncpa [#allocation3], 0
    %s14 = scalar_lea.sflag [#allocation3], 1
    %15 = vsyncpa %s14, 0
    %16 = vsyncpa [#allocation6], 0
    %17 = vsyncpa [#allocation9], 0
    %18 = vsyncpa [#allocation4], 0
    %s19 = scalar_lea.sflag [#allocation4], 1
    %20 = vsyncpa %s19, 0
    loop: start=0, step=1, limit=4
    $region2: #{tpu_custom_call.1} parent=1 // loop_pre_header
      _
    $region3: #{tpu_custom_call.1} parent=1 // loop_header
      %s22 = sphi 0, %s26
      %p23 = scmp.ge.s32.totalorder %s22, 4
      %s32 = sphi 0, %s34
      %s35 = sphi 0, %s32
      %s36 = sphi 0, %s35
      %s52 = sphi 0, %s36
      %s58 = sphi 0, %s60
      %s61 = sphi 0, %s58
      %s62 = sphi 0, %s61
      %s78 = sphi 0, %s62
      %s82 = sphi 0, %s82
      %s84 = sphi 0, %s82
      %s85 = sphi 0, %s84
      %s99 = sphi 0, %s85
      %s103 = sphi 0, %s103
      %s105 = sphi 0, %s103
      %s106 = sphi 0, %s105
      %s120 = sphi 0, %s106
      %s124 = sphi 0, %s124
      %s126 = sphi 0, %s124
      %s127 = sphi 0, %s126
      %s141 = sphi 0, %s127
      %s145 = sphi 0, %s145
      %s147 = sphi 0, %s145
      %s148 = sphi 0, %s147
      %s162 = sphi 0, %s148
      %s166 = sphi 0, %s166
      %s168 = sphi 0, %s166
      %s169 = sphi 0, %s168
      %s183 = sphi 0, %s169
      %s187 = sphi 0, %s187
      %s189 = sphi 0, %s187
      %s190 = sphi 0, %s189
      %s204 = sphi 0, %s190
      %s210 = sphi 0, %s212
      %s213 = sphi 0, %s210
      %s214 = sphi 0, %s213
      %s230 = sphi 0, %s214
    $region4: #{tpu_custom_call.1} parent=1 // loop_header_branch
      %25 = sbr.rel (%p23) target = $region8
    $region5: #{tpu_custom_call.1} parent=1 // loop_body
      %s27 = ssub.s32 %s22, 1
      %s28 = ssub.s32 %s22, 2
      %s29 = sadd.s32 %s22, 1
      %s30 = ssub.s32 %s22, %s29
      %p31 = scmp.eq.s32.totalorder %s30, 0
      %s33 = sadd.s32 %s32, 1
      %s34 = scalar_select %p31, %s32, %s33
      %p37 = pneg %p31
      %p38 = scmp.eq.s32.totalorder %s22, 1
      %p39 = por %p37, %p38
      %p40 = scmp.ne.s32.totalorder %s32, %s35
      %p41 = scmp.eq.s32.totalorder %s22, 0
      %p42 = por %p40, %p41
      %p43 = scmp.ne.s32.totalorder %s32, %s35
      %p44 = scmp.eq.s32.totalorder %s27, 1
      %p45 = por %p43, %p44
      %p46 = scmp.ne.s32.totalorder %s35, %s36
      %p47 = scmp.eq.s32.totalorder %s27, 0
      %p48 = por %p46, %p47
      %p49 = scmp.ne.s32.totalorder %s35, %s36
      %p50 = scmp.eq.s32.totalorder %s28, 1
      %p51 = por %p49, %p50
      %p53 = scmp.ne.s32.totalorder %s36, %s52
      %p54 = scmp.eq.s32.totalorder %s28, 0
      %p55 = por %p53, %p54
      %s56 = ssub.s32 %s22, %s29
      %p57 = scmp.eq.s32.totalorder %s56, 0
      %s59 = sadd.s32 %s58, 1
      %s60 = scalar_select %p57, %s58, %s59
      %p63 = pneg %p57
      %p64 = scmp.eq.s32.totalorder %s22, 1
      %p65 = por %p63, %p64
      %p66 = scmp.ne.s32.totalorder %s58, %s61
      %p67 = scmp.eq.s32.totalorder %s22, 0
      %p68 = por %p66, %p67
      %p69 = scmp.ne.s32.totalorder %s58, %s61
      %p70 = scmp.eq.s32.totalorder %s27, 1
      %p71 = por %p69, %p70
      %p72 = scmp.ne.s32.totalorder %s61, %s62
      %p73 = scmp.eq.s32.totalorder %s27, 0
      %p74 = por %p72, %p73
      %p75 = scmp.ne.s32.totalorder %s61, %s62
      %p76 = scmp.eq.s32.totalorder %s28, 1
      %p77 = por %p75, %p76
      %p79 = scmp.ne.s32.totalorder %s62, %s78
      %p80 = scmp.eq.s32.totalorder %s28, 0
      %p81 = por %p79, %p80
      %s83 = sadd.s32 %s82, 1
      %p86 = scmp.eq.s32.totalorder %s22, 1
      %p87 = scmp.ne.s32.totalorder %s82, %s84
      %p88 = scmp.eq.s32.totalorder %s22, 0
      %p89 = por %p87, %p88
      %p90 = scmp.ne.s32.totalorder %s82, %s84
      %p91 = scmp.eq.s32.totalorder %s27, 1
      %p92 = por %p90, %p91
      %p93 = scmp.ne.s32.totalorder %s84, %s85
      %p94 = scmp.eq.s32.totalorder %s27, 0
      %p95 = por %p93, %p94
      %p96 = scmp.ne.s32.totalorder %s84, %s85
      %p97 = scmp.eq.s32.totalorder %s28, 1
      %p98 = por %p96, %p97
      %p100 = scmp.ne.s32.totalorder %s85, %s99
      %p101 = scmp.eq.s32.totalorder %s28, 0
      %p102 = por %p100, %p101
      %s104 = sadd.s32 %s103, 1
      %p107 = scmp.eq.s32.totalorder %s22, 1
      %p108 = scmp.ne.s32.totalorder %s103, %s105
      %p109 = scmp.eq.s32.totalorder %s22, 0
      %p110 = por %p108, %p109
      %p111 = scmp.ne.s32.totalorder %s103, %s105
      %p112 = scmp.eq.s32.totalorder %s27, 1
      %p113 = por %p111, %p112
      %p114 = scmp.ne.s32.totalorder %s105, %s106
      %p115 = scmp.eq.s32.totalorder %s27, 0
      %p116 = por %p114, %p115
      %p117 = scmp.ne.s32.totalorder %s105, %s106
      %p118 = scmp.eq.s32.totalorder %s28, 1
      %p119 = por %p117, %p118
      %p121 = scmp.ne.s32.totalorder %s106, %s120
      %p122 = scmp.eq.s32.totalorder %s28, 0
      %p123 = por %p121, %p122
      %s125 = sadd.s32 %s124, 1
      %p128 = scmp.eq.s32.totalorder %s22, 1
      %p129 = scmp.ne.s32.totalorder %s124, %s126
      %p130 = scmp.eq.s32.totalorder %s22, 0
      %p131 = por %p129, %p130
      %p132 = scmp.ne.s32.totalorder %s124, %s126
      %p133 = scmp.eq.s32.totalorder %s27, 1
      %p134 = por %p132, %p133
      %p135 = scmp.ne.s32.totalorder %s126, %s127
      %p136 = scmp.eq.s32.totalorder %s27, 0
      %p137 = por %p135, %p136
      %p138 = scmp.ne.s32.totalorder %s126, %s127
      %p139 = scmp.eq.s32.totalorder %s28, 1
      %p140 = por %p138, %p139
      %p142 = scmp.ne.s32.totalorder %s127, %s141
      %p143 = scmp.eq.s32.totalorder %s28, 0
      %p144 = por %p142, %p143
      %s146 = sadd.s32 %s145, 1
      %p149 = scmp.eq.s32.totalorder %s22, 1
      %p150 = scmp.ne.s32.totalorder %s145, %s147
      %p151 = scmp.eq.s32.totalorder %s22, 0
      %p152 = por %p150, %p151
      %p153 = scmp.ne.s32.totalorder %s145, %s147
      %p154 = scmp.eq.s32.totalorder %s27, 1
      %p155 = por %p153, %p154
      %p156 = scmp.ne.s32.totalorder %s147, %s148
      %p157 = scmp.eq.s32.totalorder %s27, 0
      %p158 = por %p156, %p157
      %p159 = scmp.ne.s32.totalorder %s147, %s148
      %p160 = scmp.eq.s32.totalorder %s28, 1
      %p161 = por %p159, %p160
      %p163 = scmp.ne.s32.totalorder %s148, %s162
      %p164 = scmp.eq.s32.totalorder %s28, 0
      %p165 = por %p163, %p164
      %s167 = sadd.s32 %s166, 1
      %p170 = scmp.eq.s32.totalorder %s22, 1
      %p171 = scmp.ne.s32.totalorder %s166, %s168
      %p172 = scmp.eq.s32.totalorder %s22, 0
      %p173 = por %p171, %p172
      %p174 = scmp.ne.s32.totalorder %s166, %s168
      %p175 = scmp.eq.s32.totalorder %s27, 1
      %p176 = por %p174, %p175
      %p177 = scmp.ne.s32.totalorder %s168, %s169
      %p178 = scmp.eq.s32.totalorder %s27, 0
      %p179 = por %p177, %p178
      %p180 = scmp.ne.s32.totalorder %s168, %s169
      %p181 = scmp.eq.s32.totalorder %s28, 1
      %p182 = por %p180, %p181
      %p184 = scmp.ne.s32.totalorder %s169, %s183
      %p185 = scmp.eq.s32.totalorder %s28, 0
      %p186 = por %p184, %p185
      %s188 = sadd.s32 %s187, 1
      %p191 = scmp.eq.s32.totalorder %s22, 1
      %p192 = scmp.ne.s32.totalorder %s187, %s189
      %p193 = scmp.eq.s32.totalorder %s22, 0
      %p194 = por %p192, %p193
      %p195 = scmp.ne.s32.totalorder %s187, %s189
      %p196 = scmp.eq.s32.totalorder %s27, 1
      %p197 = por %p195, %p196
      %p198 = scmp.ne.s32.totalorder %s189, %s190
      %p199 = scmp.eq.s32.totalorder %s27, 0
      %p200 = por %p198, %p199
      %p201 = scmp.ne.s32.totalorder %s189, %s190
      %p202 = scmp.eq.s32.totalorder %s28, 1
      %p203 = por %p201, %p202
      %p205 = scmp.ne.s32.totalorder %s190, %s204
      %p206 = scmp.eq.s32.totalorder %s28, 0
      %p207 = por %p205, %p206
      %s208 = ssub.s32 %s22, %s29
      %p209 = scmp.eq.s32.totalorder %s208, 0
      %s211 = sadd.s32 %s210, 1
      %s212 = scalar_select %p209, %s210, %s211
      %p215 = pneg %p209
      %p216 = scmp.eq.s32.totalorder %s22, 1
      %p217 = por %p215, %p216
      %p218 = scmp.ne.s32.totalorder %s210, %s213
      %p219 = scmp.eq.s32.totalorder %s22, 0
      %p220 = por %p218, %p219
      %p221 = scmp.ne.s32.totalorder %s210, %s213
      %p222 = scmp.eq.s32.totalorder %s27, 1
      %p223 = por %p221, %p222
      %p224 = scmp.ne.s32.totalorder %s213, %s214
      %p225 = scmp.eq.s32.totalorder %s27, 0
      %p226 = por %p224, %p225
      %p227 = scmp.ne.s32.totalorder %s213, %s214
      %p228 = scmp.eq.s32.totalorder %s28, 1
      %p229 = por %p227, %p228
      %p231 = scmp.ne.s32.totalorder %s214, %s230
      %p232 = scmp.eq.s32.totalorder %s28, 0
      %p233 = por %p231, %p232
      %p234 = scmp.le.s32.totalorder 1, %s22
      %p235 = scmp.lt.s32.totalorder %s22, 3
      %p236 = pnand %p234, %p235
      %p237 = pneg %p236
      // Predicated region
      $region9: #{tpu_custom_call.1} parent=5 // pred_check
        _
      $region10: #{tpu_custom_call.1} parent=5 // pred_check_branch
        %239 = sbr.rel (%p236) target = $region12
      $region11: #{tpu_custom_call.1} parent=5 // pred_region
        %s240 = ssub.s32 %s22, 1
        // Predicated region
        $region13: #{tpu_custom_call.1} parent=11 // pred_check
          %p241 = pneg %p95
        $region14: #{tpu_custom_call.1} parent=11 // pred_check_branch
          %243 = sbr.rel (%p241) target = $region16
        $region15: #{tpu_custom_call.1} parent=11 // pred_region
          %s245 = ssub.s32 512, 512
          %246 = vsyncadd [#allocation6], %s245
          %s247 = sshll.u32 [#allocation5], 4
          %s248 = int_to_ptr.vmem [resolvable:$true] %s247
          %253 = dma.hbm_to_vmem [thread:$0]  %s2, 512, %s248, [#allocation6], 128, 128, 8
        $region16: #{tpu_custom_call.1} parent=11 // pred_fallthru
          _
        // Predicated region
        $region17: #{tpu_custom_call.1} parent=11 // pred_check
          %p254 = pneg %p116
        $region18: #{tpu_custom_call.1} parent=11 // pred_check_branch
          %256 = sbr.rel (%p254) target = $region20
        $region19: #{tpu_custom_call.1} parent=11 // pred_region
          _
        $region20: #{tpu_custom_call.1} parent=11 // pred_fallthru
          _
        // Predicated region
        $region21: #{tpu_custom_call.1} parent=11 // pred_check
          %p257 = pneg %p137
        $region22: #{tpu_custom_call.1} parent=11 // pred_check_branch
          %259 = sbr.rel (%p257) target = $region24
        $region23: #{tpu_custom_call.1} parent=11 // pred_region
          %s261 = ssub.s32 512, 512
          %262 = vsyncadd [#allocation6], %s261
          %s263 = sshll.u32 [#allocation7], 4
          %s264 = int_to_ptr.vmem [resolvable:$true] %s263
          %269 = dma.hbm_to_vmem [thread:$0]  %s4, 512, %s264, [#allocation6], 128, 128, 8
        $region24: #{tpu_custom_call.1} parent=11 // pred_fallthru
          _
        // Predicated region
        $region25: #{tpu_custom_call.1} parent=11 // pred_check
          %p270 = pneg %p158
        $region26: #{tpu_custom_call.1} parent=11 // pred_check_branch
          %272 = sbr.rel (%p270) target = $region28
        $region27: #{tpu_custom_call.1} parent=11 // pred_region
          _
        $region28: #{tpu_custom_call.1} parent=11 // pred_fallthru
          _
        // Predicated region
        $region29: #{tpu_custom_call.1} parent=11 // pred_check
          %p273 = pneg %p179
        $region30: #{tpu_custom_call.1} parent=11 // pred_check_branch
          %275 = sbr.rel (%p273) target = $region32
        $region31: #{tpu_custom_call.1} parent=11 // pred_region
          %s277 = ssub.s32 512, 512
          %278 = vsyncadd [#allocation9], %s277
          %s279 = sshll.u32 [#allocation8], 4
          %s280 = int_to_ptr.vmem [resolvable:$true] %s279
          %285 = dma.hbm_to_vmem [thread:$0]  %s6, 512, %s280, [#allocation9], 128, 128, 8
        $region32: #{tpu_custom_call.1} parent=11 // pred_fallthru
          _
        // Predicated region
        $region33: #{tpu_custom_call.1} parent=11 // pred_check
          %p286 = pneg %p200
        $region34: #{tpu_custom_call.1} parent=11 // pred_check_branch
          %288 = sbr.rel (%p286) target = $region36
        $region35: #{tpu_custom_call.1} parent=11 // pred_region
          _
        $region36: #{tpu_custom_call.1} parent=11 // pred_fallthru
          _
      $region12: #{tpu_custom_call.1} parent=5 // pred_fallthru
        _
      %p289 = scmp.lt.s32.totalorder %s22, 2
      // Predicated region
      $region37: #{tpu_custom_call.1} parent=5 // pred_check
        %p290 = pneg %p289
      $region38: #{tpu_custom_call.1} parent=5 // pred_check_branch
        %292 = sbr.rel (%p290) target = $region40
      $region39: #{tpu_custom_call.1} parent=5 // pred_region
        // Predicated region
        $region41: #{tpu_custom_call.1} parent=39 // pred_check
          %p293 = pneg %p42
        $region42: #{tpu_custom_call.1} parent=39 // pred_check_branch
          %295 = sbr.rel (%p293) target = $region44
        $region43: #{tpu_custom_call.1} parent=39 // pred_region
          %s296 = sand.u32 %s32, 1
          %s297 = scalar_lea.sflag [#allocation3], %s296
          %s298 = sand.u32 %s32, 1
          %s299 = smul.addr %s298, 8
          %s300 = scalar_lea.vmem [#allocation2], %s299
          %s302 = ssub.s32 128, 128
          %303 = vsyncadd %s297, %s302
          %s304 = smul.addr %s22, 128
          %s305 = scalar_lea.hbm %s0, %s304
          %s307 = sshll.u32 %s300, 4
          %s308 = int_to_ptr.vmem [resolvable:$true] %s307
          %310 = dma.hbm_to_vmem [thread:$0]  %s305, 128, %s308, %s297
        $region44: #{tpu_custom_call.1} parent=39 // pred_fallthru
          _
        // Predicated region
        $region45: #{tpu_custom_call.1} parent=39 // pred_check
          %p311 = pneg %p68
        $region46: #{tpu_custom_call.1} parent=39 // pred_check_branch
          %313 = sbr.rel (%p311) target = $region48
        $region47: #{tpu_custom_call.1} parent=39 // pred_region
          %p314 = scmp.lt.s32.totalorder %s22, 1
          %s315 = scalar_select %p314, %s22, 1
          %s316 = scalar_lea.vmem %s1, %s315
        $region48: #{tpu_custom_call.1} parent=39 // pred_fallthru
          _
      $region40: #{tpu_custom_call.1} parent=5 // pred_fallthru
        _
      %p317 = scmp.le.s32.totalorder 1, %s22
      %p318 = scmp.lt.s32.totalorder %s22, 3
      %p319 = pnand %p317, %p318
      %p320 = pneg %p319
      // Predicated region
      $region49: #{tpu_custom_call.1} parent=5 // pred_check
        _
      $region50: #{tpu_custom_call.1} parent=5 // pred_check_branch
        %322 = sbr.rel (%p319) target = $region52
      $region51: #{tpu_custom_call.1} parent=5 // pred_region
        %s323 = ssub.s32 %s22, 1
        %s324 = sand.u32 %s35, 1
        %s325 = scalar_lea.sflag [#allocation3], %s324
        %s326 = sand.u32 %s35, 1
        %s327 = smul.addr %s326, 8
        %s328 = scalar_lea.vmem [#allocation2], %s327
        // Predicated region
        $region53: #{tpu_custom_call.1} parent=51 // pred_check
          %p329 = pneg %p48
        $region54: #{tpu_custom_call.1} parent=51 // pred_check_branch
          %331 = sbr.rel (%p329) target = $region56
        $region55: #{tpu_custom_call.1} parent=51 // pred_region
          %332 = dma.done %s325, 128
        $region56: #{tpu_custom_call.1} parent=51 // pred_fallthru
          _
        // Predicated region
        $region57: #{tpu_custom_call.1} parent=51 // pred_check
          %p333 = pneg %p95
        $region58: #{tpu_custom_call.1} parent=51 // pred_check_branch
          %335 = sbr.rel (%p333) target = $region60
        $region59: #{tpu_custom_call.1} parent=51 // pred_region
          %336 = dma.done [#allocation6], 512
        $region60: #{tpu_custom_call.1} parent=51 // pred_fallthru
          _
        // Predicated region
        $region61: #{tpu_custom_call.1} parent=51 // pred_check
          %p337 = pneg %p137
        $region62: #{tpu_custom_call.1} parent=51 // pred_check_branch
          %339 = sbr.rel (%p337) target = $region64
        $region63: #{tpu_custom_call.1} parent=51 // pred_region
          %340 = dma.done [#allocation6], 512
        $region64: #{tpu_custom_call.1} parent=51 // pred_fallthru
          _
        // Predicated region
        $region65: #{tpu_custom_call.1} parent=51 // pred_check
          %p341 = pneg %p179
        $region66: #{tpu_custom_call.1} parent=51 // pred_check_branch
          %343 = sbr.rel (%p341) target = $region68
        $region67: #{tpu_custom_call.1} parent=51 // pred_region
          %344 = dma.done [#allocation9], 512
        $region68: #{tpu_custom_call.1} parent=51 // pred_fallthru
          _
        %s345 = sand.u32 %s35, 1
        %s346 = scalar_lea.sflag [#allocation3], %s345
        %s347 = sand.u32 %s35, 1
        %s348 = smul.addr %s347, 8
        %s349 = scalar_lea.vmem [#allocation2], %s348
        %p350 = pneg %p48
        %p351 = pneg %p45
        %p352 = scmp.lt.s32.totalorder %s27, 1
        %s353 = scalar_select %p352, %s27, 1
        %s354 = scalar_lea.vmem %s1, %s353
        %p355 = pneg %p74
        %p356 = pneg %p71
        %p357 = pneg %p95
        %p358 = pneg %p92
        %p359 = pneg %p116
        %p360 = pneg %p113
        %p361 = pneg %p137
        %p362 = pneg %p134
        %p363 = pneg %p158
        %p364 = pneg %p155
        %p365 = pneg %p179
        %p366 = pneg %p176
        %p367 = pneg %p200
        %p368 = pneg %p197
        %p369 = pneg %p226
        %p370 = pneg %p223
        %s371 = sand.u32 %s213, 1
        %s372 = scalar_lea.sflag [#allocation4], %s371
        %s373 = sand.u32 %s213, 1
        %s374 = smul.addr %s373, 8
        %s375 = scalar_lea.vmem [#allocation10], %s374
        %p376 = scmp.lt.s32.totalorder %s27, 1
        %s377 = scalar_select %p376, %s27, 1
        %s378 = scalar_lea.vmem %s1, %s377
        %v379 = vld [vmem:[%s328] sm:$0xff]
        %v380 = vld [vmem:[%s378] sm:$0x1]
        %v381 = vsub.f32 1.0, %v380
        %v382 = vmul.f32 %v381, 10000.0
        %v383 = vld [vmem:[#allocation5] sm:$0xff]
        %v384 = vld [vmem:[#allocation5 + $0x8] sm:$0xff]
        %v385 = vld [vmem:[#allocation5 + $0x10] sm:$0xff]
        %v386 = vld [vmem:[#allocation5 + $0x18] sm:$0xff]
        %v387 = vld [vmem:[%s3] sm:$0x1]
        %v389 = vlaneseq
        %v390 = vshrl.u32 %v389, 7
        %v391 = vsub.s32 0, %v390
        %v392 = vrot.slane %v387, %v391
        %vm394 = vcmask 261120
        %v396 = vsel %vm394, %v379, 0
        %398 = vmatprep.subr.mxu0 0.0
        %399 = vmatpush1.msra.mxu0 %v383
        %400 = vmatprep.subr.mxu0 0.0
        %401 = vmatpush1.msra.mxu0 %v384
        %402 = vmatprep.subr.mxu0 0.0
        %403 = vmatpush1.msra.mxu0 %v385
        %404 = vmatprep.subr.mxu0 0.0
        %405 = vmatpush1.msra.mxu0 %v386
        %406 = vmatprep.subr.mxu0 0.0
        %407 = vmatpush1.msra.mxu0 0.0
        %408 = vmatprep.subr.mxu0 0.0
        %409 = vmatpush1.msra.mxu0 0.0
        %410 = vmatprep.subr.mxu0 0.0
        %411 = vmatpush1.msra.mxu0 0.0
        %412 = vmatprep.subr.mxu0 0.0
        %413 = vmatpush1.msra.mxu0 0.0
        %414 = vmatprep.subr.mxu0 0.0
        %415 = vmatpush1.msra.mxu0 0.0
        %416 = vmatprep.subr.mxu0 0.0
        %417 = vmatpush1.msra.mxu0 0.0
        %418 = vmatprep.subr.mxu0 0.0
        %419 = vmatpush1.msra.mxu0 0.0
        %420 = vmatprep.subr.mxu0 0.0
        %421 = vmatpush1.msra.mxu0 0.0
        %422 = vmatprep.subr.mxu0 0.0
        %423 = vmatpush1.msra.mxu0 0.0
        %424 = vmatprep.subr.mxu0 0.0
        %425 = vmatpush1.msra.mxu0 0.0
        %426 = vmatprep.subr.mxu0 0.0
        %427 = vmatpush1.msra.mxu0 0.0
        %428 = vmatprep.subr.mxu0 0.0
        %429 = vmatpush1.msra.mxu0 0.0
        %430 = vmatprep.subr.mxu0 0.0
        %431 = vmatpush1.msra.mxu0 0.0
        %432 = vmatprep.subr.mxu0 0.0
        %433 = vmatpush1.msra.mxu0 0.0
        %434 = vmatprep.subr.mxu0 0.0
        %435 = vmatpush1.msra.mxu0 0.0
        %436 = vmatprep.subr.mxu0 0.0
        %437 = vmatpush1.msra.mxu0 0.0
        %438 = vmatprep.subr.mxu0 0.0
        %439 = vmatpush1.msra.mxu0 0.0
        %440 = vmatprep.subr.mxu0 0.0
        %441 = vmatpush1.msra.mxu0 0.0
        %442 = vmatprep.subr.mxu0 0.0
        %443 = vmatpush1.msra.mxu0 0.0
        %444 = vmatprep.subr.mxu0 0.0
        %445 = vmatpush1.msra.mxu0 0.0
        %446 = vmatprep.subr.mxu0 0.0
        %447 = vmatpush1.msra.mxu0 0.0
        %448 = vmatprep.subr.mxu0 0.0
        %449 = vmatpush1.msra.mxu0 0.0
        %450 = vmatprep.subr.mxu0 0.0
        %451 = vmatpush1.msra.mxu0 0.0
        %452 = vmatprep.subr.mxu0 0.0
        %453 = vmatpush1.msra.mxu0 0.0
        %454 = vmatprep.subr.mxu0 0.0
        %455 = vmatpush1.msra.mxu0 0.0
        %456 = vmatprep.subr.mxu0 0.0
        %457 = vmatpush1.msra.mxu0 0.0
        %458 = vmatprep.subr.mxu0 0.0
        %459 = vmatpush1.msra.mxu0 0.0
        %460 = vmatprep.subr.mxu0 0.0
        %461 = vmatpush1.msra.mxu0 0.0
        %462 = vmatprep.mubr.f32.mxu0 0.0
        %463 = vmatmul.mubr.f32.gmra.mrb[0].mxu0 %v396
        %v464 = vpop.f32.mrb[0].mxu0
        %v465 = vadd.f32 %v392, %v464
        %v466 = vpop.f32.mrb[0].mxu0
        %467 = vdwg.mxu0
        %v468 = vmul.f32 %v465, 0.35355338
        %v469 = vld [vmem:[#allocation7] sm:$0xff]
        %v470 = vld [vmem:[#allocation7 + $0x8] sm:$0xff]
        %v471 = vld [vmem:[#allocation7 + $0x10] sm:$0xff]
        %v472 = vld [vmem:[#allocation7 + $0x18] sm:$0xff]
        %v473 = vld [vmem:[%s5] sm:$0x1]
        %v475 = vlaneseq
        %v476 = vshrl.u32 %v475, 7
        %v477 = vsub.s32 0, %v476
        %v478 = vrot.slane %v473, %v477
        %480 = vmatprep.subr.mxu0 0.0
        %481 = vmatpush1.msra.mxu0 %v469
        %482 = vmatprep.subr.mxu0 0.0
        %483 = vmatpush1.msra.mxu0 %v470
        %484 = vmatprep.subr.mxu0 0.0
        %485 = vmatpush1.msra.mxu0 %v471
        %486 = vmatprep.subr.mxu0 0.0
        %487 = vmatpush1.msra.mxu0 %v472
        %488 = vmatprep.subr.mxu0 0.0
        %489 = vmatpush1.msra.mxu0 0.0
        %490 = vmatprep.subr.mxu0 0.0
        %491 = vmatpush1.msra.mxu0 0.0
        %492 = vmatprep.subr.mxu0 0.0
        %493 = vmatpush1.msra.mxu0 0.0
        %494 = vmatprep.subr.mxu0 0.0
        %495 = vmatpush1.msra.mxu0 0.0
        %496 = vmatprep.subr.mxu0 0.0
        %497 = vmatpush1.msra.mxu0 0.0
        %498 = vmatprep.subr.mxu0 0.0
        %499 = vmatpush1.msra.mxu0 0.0
        %500 = vmatprep.subr.mxu0 0.0
        %501 = vmatpush1.msra.mxu0 0.0
        %502 = vmatprep.subr.mxu0 0.0
        %503 = vmatpush1.msra.mxu0 0.0
        %504 = vmatprep.subr.mxu0 0.0
        %505 = vmatpush1.msra.mxu0 0.0
        %506 = vmatprep.subr.mxu0 0.0
        %507 = vmatpush1.msra.mxu0 0.0
        %508 = vmatprep.subr.mxu0 0.0
        %509 = vmatpush1.msra.mxu0 0.0
        %510 = vmatprep.subr.mxu0 0.0
        %511 = vmatpush1.msra.mxu0 0.0
        %512 = vmatprep.subr.mxu0 0.0
        %513 = vmatpush1.msra.mxu0 0.0
        %514 = vmatprep.subr.mxu0 0.0
        %515 = vmatpush1.msra.mxu0 0.0
        %516 = vmatprep.subr.mxu0 0.0
        %517 = vmatpush1.msra.mxu0 0.0
        %518 = vmatprep.subr.mxu0 0.0
        %519 = vmatpush1.msra.mxu0 0.0
        %520 = vmatprep.subr.mxu0 0.0
        %521 = vmatpush1.msra.mxu0 0.0
        %522 = vmatprep.subr.mxu0 0.0
        %523 = vmatpush1.msra.mxu0 0.0
        %524 = vmatprep.subr.mxu0 0.0
        %525 = vmatpush1.msra.mxu0 0.0
        %526 = vmatprep.subr.mxu0 0.0
        %527 = vmatpush1.msra.mxu0 0.0
        %528 = vmatprep.subr.mxu0 0.0
        %529 = vmatpush1.msra.mxu0 0.0
        %530 = vmatprep.subr.mxu0 0.0
        %531 = vmatpush1.msra.mxu0 0.0
        %532 = vmatprep.subr.mxu0 0.0
        %533 = vmatpush1.msra.mxu0 0.0
        %534 = vmatprep.subr.mxu0 0.0
        %535 = vmatpush1.msra.mxu0 0.0
        %536 = vmatprep.subr.mxu0 0.0
        %537 = vmatpush1.msra.mxu0 0.0
        %538 = vmatprep.subr.mxu0 0.0
        %539 = vmatpush1.msra.mxu0 0.0
        %540 = vmatprep.subr.mxu0 0.0
        %541 = vmatpush1.msra.mxu0 0.0
        %542 = vmatprep.subr.mxu0 0.0
        %543 = vmatpush1.msra.mxu0 0.0
        %544 = vmatprep.mubr.f32.mxu0 0.0
        %545 = vmatmul.mubr.f32.gmra.mrb[0].mxu0 %v396
        %v546 = vpop.f32.mrb[0].mxu0
        %v547 = vadd.f32 %v478, %v546
        %v548 = vpop.f32.mrb[0].mxu0
        %549 = vdwg.mxu0
        %v550 = vld [vmem:[#allocation8] sm:$0xff]
        %v551 = vld [vmem:[#allocation8 + $0x8] sm:$0xff]
        %v552 = vld [vmem:[#allocation8 + $0x10] sm:$0xff]
        %v553 = vld [vmem:[#allocation8 + $0x18] sm:$0xff]
        %v554 = vld [vmem:[%s7] sm:$0x1]
        %v556 = vlaneseq
        %v557 = vshrl.u32 %v556, 7
        %v558 = vsub.s32 0, %v557
        %v559 = vrot.slane %v554, %v558
        %561 = vmatprep.subr.mxu0 0.0
        %562 = vmatpush1.msra.mxu0 %v550
        %563 = vmatprep.subr.mxu0 0.0
        %564 = vmatpush1.msra.mxu0 %v551
        %565 = vmatprep.subr.mxu0 0.0
        %566 = vmatpush1.msra.mxu0 %v552
        %567 = vmatprep.subr.mxu0 0.0
        %568 = vmatpush1.msra.mxu0 %v553
        %569 = vmatprep.subr.mxu0 0.0
        %570 = vmatpush1.msra.mxu0 0.0
        %571 = vmatprep.subr.mxu0 0.0
        %572 = vmatpush1.msra.mxu0 0.0
        %573 = vmatprep.subr.mxu0 0.0
        %574 = vmatpush1.msra.mxu0 0.0
        %575 = vmatprep.subr.mxu0 0.0
        %576 = vmatpush1.msra.mxu0 0.0
        %577 = vmatprep.subr.mxu0 0.0
        %578 = vmatpush1.msra.mxu0 0.0
        %579 = vmatprep.subr.mxu0 0.0
        %580 = vmatpush1.msra.mxu0 0.0
        %581 = vmatprep.subr.mxu0 0.0
        %582 = vmatpush1.msra.mxu0 0.0
        %583 = vmatprep.subr.mxu0 0.0
        %584 = vmatpush1.msra.mxu0 0.0
        %585 = vmatprep.subr.mxu0 0.0
        %586 = vmatpush1.msra.mxu0 0.0
        %587 = vmatprep.subr.mxu0 0.0
        %588 = vmatpush1.msra.mxu0 0.0
        %589 = vmatprep.subr.mxu0 0.0
        %590 = vmatpush1.msra.mxu0 0.0
        %591 = vmatprep.subr.mxu0 0.0
        %592 = vmatpush1.msra.mxu0 0.0
        %593 = vmatprep.subr.mxu0 0.0
        %594 = vmatpush1.msra.mxu0 0.0
        %595 = vmatprep.subr.mxu0 0.0
        %596 = vmatpush1.msra.mxu0 0.0
        %597 = vmatprep.subr.mxu0 0.0
        %598 = vmatpush1.msra.mxu0 0.0
        %599 = vmatprep.subr.mxu0 0.0
        %600 = vmatpush1.msra.mxu0 0.0
        %601 = vmatprep.subr.mxu0 0.0
        %602 = vmatpush1.msra.mxu0 0.0
        %603 = vmatprep.subr.mxu0 0.0
        %604 = vmatpush1.msra.mxu0 0.0
        %605 = vmatprep.subr.mxu0 0.0
        %606 = vmatpush1.msra.mxu0 0.0
        %607 = vmatprep.subr.mxu0 0.0
        %608 = vmatpush1.msra.mxu0 0.0
        %609 = vmatprep.subr.mxu0 0.0
        %610 = vmatpush1.msra.mxu0 0.0
        %611 = vmatprep.subr.mxu0 0.0
        %612 = vmatpush1.msra.mxu0 0.0
        %613 = vmatprep.subr.mxu0 0.0
        %614 = vmatpush1.msra.mxu0 0.0
        %615 = vmatprep.subr.mxu0 0.0
        %616 = vmatpush1.msra.mxu0 0.0
        %617 = vmatprep.subr.mxu0 0.0
        %618 = vmatpush1.msra.mxu0 0.0
        %619 = vmatprep.subr.mxu0 0.0
        %620 = vmatpush1.msra.mxu0 0.0
        %621 = vmatprep.subr.mxu0 0.0
        %622 = vmatpush1.msra.mxu0 0.0
        %623 = vmatprep.subr.mxu0 0.0
        %624 = vmatpush1.msra.mxu0 0.0
        %625 = vmatprep.mubr.f32.mxu0 0.0
        %626 = vmatmul.mubr.f32.gmra.mrb[0].mxu0 %v396
        %v627 = vpop.f32.mrb[0].mxu0
        %v628 = vadd.f32 %v559, %v627
        %v629 = vpop.f32.mrb[0].mxu0
        %630 = vdwg.mxu0
        %vm631 = vcmask 64512
        %v633 = vsel %vm631, %v468, 0
        %v636 = vsel %vm631, %v547, 0
        %638 = vmatprep.subr.mxu0 0.0
        %639 = vmatpush1.xpose.msra.mxu0 %v636
        %640 = vmatprep.subr.mxu0 0.0
        %641 = vmatpush1.xpose.msra.mxu0 0.0
        %642 = vmatprep.subr.mxu0 0.0
        %643 = vmatpush1.xpose.msra.mxu0 0.0
        %644 = vmatprep.subr.mxu0 0.0
        %645 = vmatpush1.xpose.msra.mxu0 0.0
        %646 = vmatprep.subr.mxu0 0.0
        %647 = vmatpush1.xpose.msra.mxu0 0.0
        %648 = vmatprep.subr.mxu0 0.0
        %649 = vmatpush1.xpose.msra.mxu0 0.0
        %650 = vmatprep.subr.mxu0 0.0
        %651 = vmatpush1.xpose.msra.mxu0 0.0
        %652 = vmatprep.subr.mxu0 0.0
        %653 = vmatpush1.xpose.msra.mxu0 0.0
        %654 = vmatprep.subr.mxu0 0.0
        %655 = vmatpush1.xpose.msra.mxu0 0.0
        %656 = vmatprep.subr.mxu0 0.0
        %657 = vmatpush1.xpose.msra.mxu0 0.0
        %658 = vmatprep.subr.mxu0 0.0
        %659 = vmatpush1.xpose.msra.mxu0 0.0
        %660 = vmatprep.subr.mxu0 0.0
        %661 = vmatpush1.xpose.msra.mxu0 0.0
        %662 = vmatprep.subr.mxu0 0.0
        %663 = vmatpush1.xpose.msra.mxu0 0.0
        %664 = vmatprep.subr.mxu0 0.0
        %665 = vmatpush1.xpose.msra.mxu0 0.0
        %666 = vmatprep.subr.mxu0 0.0
        %667 = vmatpush1.xpose.msra.mxu0 0.0
        %668 = vmatprep.subr.mxu0 0.0
        %669 = vmatpush1.xpose.msra.mxu0 0.0
        %670 = vmatprep.subr.mxu0 0.0
        %671 = vmatpush1.xpose.msra.mxu0 0.0
        %672 = vmatprep.subr.mxu0 0.0
        %673 = vmatpush1.xpose.msra.mxu0 0.0
        %674 = vmatprep.subr.mxu0 0.0
        %675 = vmatpush1.xpose.msra.mxu0 0.0
        %676 = vmatprep.subr.mxu0 0.0
        %677 = vmatpush1.xpose.msra.mxu0 0.0
        %678 = vmatprep.subr.mxu0 0.0
        %679 = vmatpush1.xpose.msra.mxu0 0.0
        %680 = vmatprep.subr.mxu0 0.0
        %681 = vmatpush1.xpose.msra.mxu0 0.0
        %682 = vmatprep.subr.mxu0 0.0
        %683 = vmatpush1.xpose.msra.mxu0 0.0
        %684 = vmatprep.subr.mxu0 0.0
        %685 = vmatpush1.xpose.msra.mxu0 0.0
        %686 = vmatprep.subr.mxu0 0.0
        %687 = vmatpush1.xpose.msra.mxu0 0.0
        %688 = vmatprep.subr.mxu0 0.0
        %689 = vmatpush1.xpose.msra.mxu0 0.0
        %690 = vmatprep.subr.mxu0 0.0
        %691 = vmatpush1.xpose.msra.mxu0 0.0
        %692 = vmatprep.subr.mxu0 0.0
        %693 = vmatpush1.xpose.msra.mxu0 0.0
        %694 = vmatprep.subr.mxu0 0.0
        %695 = vmatpush1.xpose.msra.mxu0 0.0
        %696 = vmatprep.subr.mxu0 0.0
        %697 = vmatpush1.xpose.msra.mxu0 0.0
        %698 = vmatprep.subr.mxu0 0.0
        %699 = vmatpush1.xpose.msra.mxu0 0.0
        %700 = vmatprep.subr.mxu0 0.0
        %701 = vmatpush1.xpose.msra.mxu0 0.0
        %702 = vmatprep.mubr.f32.mxu0 0.0
        %703 = vmatmul.mubr.f32.gmra.mrb[0].mxu0 %v633
        %v704 = vpop.f32.mrb[0].mxu0
        %v705 = vadd.f32 0.0, %v704
        %v706 = vpop.f32.mrb[0].mxu0
        %707 = vdwg.mxu0
        %v709 = vlaneseq
        %v710 = vshrl.u32 %v709, 7
        %v711 = vsub.s32 0, %v710
        %v712 = vrot.slane %v382, %v711
        %v714 = vsub.f32 %v705, %v712
        %v715 = vsel %vm631, %v714, -inf
        %716 = vmax.xlane.f32.xlu0 %v715
        %v717 = vpop.xlane.xlu0 %716
        %v718 = vsub.f32 %v714, %v717
        %v719 = vmul.f32 %v718, 1.442695
        %v720 = vpow.pop %v719
        %v721 = vsel %vm631, %v720, 0.0
        %722 = vadd.xlane.f32.xlu0 %v721
        %v723 = vpop.xlane.xlu0 %722
        %v724 = vrcp.pop %v723
        %v725 = vmul.f32 %v720, %v724
        %v727 = vsel %vm631, %v725, 0
        %729 = vmatprep.subr.mxu0 0.0
        %730 = vmatpush1.msra.mxu0 %v628
        %731 = vmatprep.subr.mxu0 0.0
        %732 = vmatpush1.msra.mxu0 0.0
        %733 = vmatprep.subr.mxu0 0.0
        %734 = vmatpush1.msra.mxu0 0.0
        %735 = vmatprep.subr.mxu0 0.0
        %736 = vmatpush1.msra.mxu0 0.0
        %737 = vmatprep.subr.mxu0 0.0
        %738 = vmatpush1.msra.mxu0 0.0
        %739 = vmatprep.subr.mxu0 0.0
        %740 = vmatpush1.msra.mxu0 0.0
        %741 = vmatprep.subr.mxu0 0.0
        %742 = vmatpush1.msra.mxu0 0.0
        %743 = vmatprep.subr.mxu0 0.0
        %744 = vmatpush1.msra.mxu0 0.0
        %745 = vmatprep.subr.mxu0 0.0
        %746 = vmatpush1.msra.mxu0 0.0
        %747 = vmatprep.subr.mxu0 0.0
        %748 = vmatpush1.msra.mxu0 0.0
        %749 = vmatprep.subr.mxu0 0.0
        %750 = vmatpush1.msra.mxu0 0.0
        %751 = vmatprep.subr.mxu0 0.0
        %752 = vmatpush1.msra.mxu0 0.0
        %753 = vmatprep.subr.mxu0 0.0
        %754 = vmatpush1.msra.mxu0 0.0
        %755 = vmatprep.subr.mxu0 0.0
        %756 = vmatpush1.msra.mxu0 0.0
        %757 = vmatprep.subr.mxu0 0.0
        %758 = vmatpush1.msra.mxu0 0.0
        %759 = vmatprep.subr.mxu0 0.0
        %760 = vmatpush1.msra.mxu0 0.0
        %761 = vmatprep.subr.mxu0 0.0
        %762 = vmatpush1.msra.mxu0 0.0
        %763 = vmatprep.subr.mxu0 0.0
        %764 = vmatpush1.msra.mxu0 0.0
        %765 = vmatprep.subr.mxu0 0.0
        %766 = vmatpush1.msra.mxu0 0.0
        %767 = vmatprep.subr.mxu0 0.0
        %768 = vmatpush1.msra.mxu0 0.0
        %769 = vmatprep.subr.mxu0 0.0
        %770 = vmatpush1.msra.mxu0 0.0
        %771 = vmatprep.subr.mxu0 0.0
        %772 = vmatpush1.msra.mxu0 0.0
        %773 = vmatprep.subr.mxu0 0.0
        %774 = vmatpush1.msra.mxu0 0.0
        %775 = vmatprep.subr.mxu0 0.0
        %776 = vmatpush1.msra.mxu0 0.0
        %777 = vmatprep.subr.mxu0 0.0
        %778 = vmatpush1.msra.mxu0 0.0
        %779 = vmatprep.subr.mxu0 0.0
        %780 = vmatpush1.msra.mxu0 0.0
        %781 = vmatprep.subr.mxu0 0.0
        %782 = vmatpush1.msra.mxu0 0.0
        %783 = vmatprep.subr.mxu0 0.0
        %784 = vmatpush1.msra.mxu0 0.0
        %785 = vmatprep.subr.mxu0 0.0
        %786 = vmatpush1.msra.mxu0 0.0
        %787 = vmatprep.subr.mxu0 0.0
        %788 = vmatpush1.msra.mxu0 0.0
        %789 = vmatprep.subr.mxu0 0.0
        %790 = vmatpush1.msra.mxu0 0.0
        %791 = vmatprep.subr.mxu0 0.0
        %792 = vmatpush1.msra.mxu0 0.0
        %793 = vmatprep.mubr.f32.mxu0 0.0
        %794 = vmatmul.mubr.f32.gmra.mrb[0].mxu0 %v727
        %v795 = vpop.f32.mrb[0].mxu0
        %v796 = vadd.f32 0.0, %v795
        %v797 = vpop.f32.mrb[0].mxu0
        %798 = vdwg.mxu0
        %799 = vrot.lane.b32.xlu0 %v468, 120
        %v800 = vpop.permute.xlu0 %799
        %801 = vrot.lane.b32.xlu0 %v547, 120
        %v802 = vpop.permute.xlu0 %801
        %v803 = vsel %vm631, %v800, 0
        %v805 = vsel %vm631, %v802, 0
        %807 = vmatprep.subr.mxu0 0.0
        %808 = vmatpush1.xpose.msra.mxu0 %v805
        %809 = vmatprep.subr.mxu0 0.0
        %810 = vmatpush1.xpose.msra.mxu0 0.0
        %811 = vmatprep.subr.mxu0 0.0
        %812 = vmatpush1.xpose.msra.mxu0 0.0
        %813 = vmatprep.subr.mxu0 0.0
        %814 = vmatpush1.xpose.msra.mxu0 0.0
        %815 = vmatprep.subr.mxu0 0.0
        %816 = vmatpush1.xpose.msra.mxu0 0.0
        %817 = vmatprep.subr.mxu0 0.0
        %818 = vmatpush1.xpose.msra.mxu0 0.0
        %819 = vmatprep.subr.mxu0 0.0
        %820 = vmatpush1.xpose.msra.mxu0 0.0
        %821 = vmatprep.subr.mxu0 0.0
        %822 = vmatpush1.xpose.msra.mxu0 0.0
        %823 = vmatprep.subr.mxu0 0.0
        %824 = vmatpush1.xpose.msra.mxu0 0.0
        %825 = vmatprep.subr.mxu0 0.0
        %826 = vmatpush1.xpose.msra.mxu0 0.0
        %827 = vmatprep.subr.mxu0 0.0
        %828 = vmatpush1.xpose.msra.mxu0 0.0
        %829 = vmatprep.subr.mxu0 0.0
        %830 = vmatpush1.xpose.msra.mxu0 0.0
        %831 = vmatprep.subr.mxu0 0.0
        %832 = vmatpush1.xpose.msra.mxu0 0.0
        %833 = vmatprep.subr.mxu0 0.0
        %834 = vmatpush1.xpose.msra.mxu0 0.0
        %835 = vmatprep.subr.mxu0 0.0
        %836 = vmatpush1.xpose.msra.mxu0 0.0
        %837 = vmatprep.subr.mxu0 0.0
        %838 = vmatpush1.xpose.msra.mxu0 0.0
        %839 = vmatprep.subr.mxu0 0.0
        %840 = vmatpush1.xpose.msra.mxu0 0.0
        %841 = vmatprep.subr.mxu0 0.0
        %842 = vmatpush1.xpose.msra.mxu0 0.0
        %843 = vmatprep.subr.mxu0 0.0
        %844 = vmatpush1.xpose.msra.mxu0 0.0
        %845 = vmatprep.subr.mxu0 0.0
        %846 = vmatpush1.xpose.msra.mxu0 0.0
        %847 = vmatprep.subr.mxu0 0.0
        %848 = vmatpush1.xpose.msra.mxu0 0.0
        %849 = vmatprep.subr.mxu0 0.0
        %850 = vmatpush1.xpose.msra.mxu0 0.0
        %851 = vmatprep.subr.mxu0 0.0
        %852 = vmatpush1.xpose.msra.mxu0 0.0
        %853 = vmatprep.subr.mxu0 0.0
        %854 = vmatpush1.xpose.msra.mxu0 0.0
        %855 = vmatprep.subr.mxu0 0.0
        %856 = vmatpush1.xpose.msra.mxu0 0.0
        %857 = vmatprep.subr.mxu0 0.0
        %858 = vmatpush1.xpose.msra.mxu0 0.0
        %859 = vmatprep.subr.mxu0 0.0
        %860 = vmatpush1.xpose.msra.mxu0 0.0
        %861 = vmatprep.subr.mxu0 0.0
        %862 = vmatpush1.xpose.msra.mxu0 0.0
        %863 = vmatprep.subr.mxu0 0.0
        %864 = vmatpush1.xpose.msra.mxu0 0.0
        %865 = vmatprep.subr.mxu0 0.0
        %866 = vmatpush1.xpose.msra.mxu0 0.0
        %867 = vmatprep.subr.mxu0 0.0
        %868 = vmatpush1.xpose.msra.mxu0 0.0
        %869 = vmatprep.subr.mxu0 0.0
        %870 = vmatpush1.xpose.msra.mxu0 0.0
        %871 = vmatprep.mubr.f32.mxu0 0.0
        %872 = vmatmul.mubr.f32.gmra.mrb[0].mxu0 %v803
        %v873 = vpop.f32.mrb[0].mxu0
        %v874 = vadd.f32 0.0, %v873
        %v875 = vpop.f32.mrb[0].mxu0
        %876 = vdwg.mxu0
        %v877 = vsub.f32 %v874, %v712
        %v878 = vsel %vm631, %v877, -inf
        %879 = vmax.xlane.f32.xlu0 %v878
        %v880 = vpop.xlane.xlu0 %879
        %v881 = vsub.f32 %v877, %v880
        %v882 = vmul.f32 %v881, 1.442695
        %v883 = vpow.pop %v882
        %v884 = vsel %vm631, %v883, 0.0
        %885 = vadd.xlane.f32.xlu0 %v884
        %v886 = vpop.xlane.xlu0 %885
        %v887 = vrcp.pop %v886
        %v888 = vmul.f32 %v883, %v887
        %890 = vrot.lane.b32.xlu0 %v628, 120
        %v891 = vpop.permute.xlu0 %890
        %v894 = vsel %vm631, %v888, 0
        %896 = vmatprep.subr.mxu0 0.0
        %897 = vmatpush1.msra.mxu0 %v891
        %898 = vmatprep.subr.mxu0 0.0
        %899 = vmatpush1.msra.mxu0 0.0
        %900 = vmatprep.subr.mxu0 0.0
        %901 = vmatpush1.msra.mxu0 0.0
        %902 = vmatprep.subr.mxu0 0.0
        %903 = vmatpush1.msra.mxu0 0.0
        %904 = vmatprep.subr.mxu0 0.0
        %905 = vmatpush1.msra.mxu0 0.0
        %906 = vmatprep.subr.mxu0 0.0
        %907 = vmatpush1.msra.mxu0 0.0
        %908 = vmatprep.subr.mxu0 0.0
        %909 = vmatpush1.msra.mxu0 0.0
        %910 = vmatprep.subr.mxu0 0.0
        %911 = vmatpush1.msra.mxu0 0.0
        %912 = vmatprep.subr.mxu0 0.0
        %913 = vmatpush1.msra.mxu0 0.0
        %914 = vmatprep.subr.mxu0 0.0
        %915 = vmatpush1.msra.mxu0 0.0
        %916 = vmatprep.subr.mxu0 0.0
        %917 = vmatpush1.msra.mxu0 0.0
        %918 = vmatprep.subr.mxu0 0.0
        %919 = vmatpush1.msra.mxu0 0.0
        %920 = vmatprep.subr.mxu0 0.0
        %921 = vmatpush1.msra.mxu0 0.0
        %922 = vmatprep.subr.mxu0 0.0
        %923 = vmatpush1.msra.mxu0 0.0
        %924 = vmatprep.subr.mxu0 0.0
        %925 = vmatpush1.msra.mxu0 0.0
        %926 = vmatprep.subr.mxu0 0.0
        %927 = vmatpush1.msra.mxu0 0.0
        %928 = vmatprep.subr.mxu0 0.0
        %929 = vmatpush1.msra.mxu0 0.0
        %930 = vmatprep.subr.mxu0 0.0
        %931 = vmatpush1.msra.mxu0 0.0
        %932 = vmatprep.subr.mxu0 0.0
        %933 = vmatpush1.msra.mxu0 0.0
        %934 = vmatprep.subr.mxu0 0.0
        %935 = vmatpush1.msra.mxu0 0.0
        %936 = vmatprep.subr.mxu0 0.0
        %937 = vmatpush1.msra.mxu0 0.0
        %938 = vmatprep.subr.mxu0 0.0
        %939 = vmatpush1.msra.mxu0 0.0
        %940 = vmatprep.subr.mxu0 0.0
        %941 = vmatpush1.msra.mxu0 0.0
        %942 = vmatprep.subr.mxu0 0.0
        %943 = vmatpush1.msra.mxu0 0.0
        %944 = vmatprep.subr.mxu0 0.0
        %945 = vmatpush1.msra.mxu0 0.0
        %946 = vmatprep.subr.mxu0 0.0
        %947 = vmatpush1.msra.mxu0 0.0
        %948 = vmatprep.subr.mxu0 0.0
        %949 = vmatpush1.msra.mxu0 0.0
        %950 = vmatprep.subr.mxu0 0.0
        %951 = vmatpush1.msra.mxu0 0.0
        %952 = vmatprep.subr.mxu0 0.0
        %953 = vmatpush1.msra.mxu0 0.0
        %954 = vmatprep.subr.mxu0 0.0
        %955 = vmatpush1.msra.mxu0 0.0
        %956 = vmatprep.subr.mxu0 0.0
        %957 = vmatpush1.msra.mxu0 0.0
        %958 = vmatprep.subr.mxu0 0.0
        %959 = vmatpush1.msra.mxu0 0.0
        %960 = vmatprep.mubr.f32.mxu0 0.0
        %961 = vmatmul.mubr.f32.gmra.mrb[0].mxu0 %v894
        %v962 = vpop.f32.mrb[0].mxu0
        %v963 = vadd.f32 0.0, %v962
        %v964 = vpop.f32.mrb[0].mxu0
        %965 = vdwg.mxu0
        %966 = vrot.lane.b32.xlu0 %v468, 112
        %v967 = vpop.permute.xlu0 %966
        %968 = vrot.lane.b32.xlu0 %v547, 112
        %v969 = vpop.permute.xlu0 %968
        %v970 = vsel %vm631, %v967, 0
        %v972 = vsel %vm631, %v969, 0
        %974 = vmatprep.subr.mxu0 0.0
        %975 = vmatpush1.xpose.msra.mxu0 %v972
        %976 = vmatprep.subr.mxu0 0.0
        %977 = vmatpush1.xpose.msra.mxu0 0.0
        %978 = vmatprep.subr.mxu0 0.0
        %979 = vmatpush1.xpose.msra.mxu0 0.0
        %980 = vmatprep.subr.mxu0 0.0
        %981 = vmatpush1.xpose.msra.mxu0 0.0
        %982 = vmatprep.subr.mxu0 0.0
        %983 = vmatpush1.xpose.msra.mxu0 0.0
        %984 = vmatprep.subr.mxu0 0.0
        %985 = vmatpush1.xpose.msra.mxu0 0.0
        %986 = vmatprep.subr.mxu0 0.0
        %987 = vmatpush1.xpose.msra.mxu0 0.0
        %988 = vmatprep.subr.mxu0 0.0
        %989 = vmatpush1.xpose.msra.mxu0 0.0
        %990 = vmatprep.subr.mxu0 0.0
        %991 = vmatpush1.xpose.msra.mxu0 0.0
        %992 = vmatprep.subr.mxu0 0.0
        %993 = vmatpush1.xpose.msra.mxu0 0.0
        %994 = vmatprep.subr.mxu0 0.0
        %995 = vmatpush1.xpose.msra.mxu0 0.0
        %996 = vmatprep.subr.mxu0 0.0
        %997 = vmatpush1.xpose.msra.mxu0 0.0
        %998 = vmatprep.subr.mxu0 0.0
        %999 = vmatpush1.xpose.msra.mxu0 0.0
        %1000 = vmatprep.subr.mxu0 0.0
        %1001 = vmatpush1.xpose.msra.mxu0 0.0
        %1002 = vmatprep.subr.mxu0 0.0
        %1003 = vmatpush1.xpose.msra.mxu0 0.0
        %1004 = vmatprep.subr.mxu0 0.0
        %1005 = vmatpush1.xpose.msra.mxu0 0.0
        %1006 = vmatprep.subr.mxu0 0.0
        %1007 = vmatpush1.xpose.msra.mxu0 0.0
        %1008 = vmatprep.subr.mxu0 0.0
        %1009 = vmatpush1.xpose.msra.mxu0 0.0
        %1010 = vmatprep.subr.mxu0 0.0
        %1011 = vmatpush1.xpose.msra.mxu0 0.0
        %1012 = vmatprep.subr.mxu0 0.0
        %1013 = vmatpush1.xpose.msra.mxu0 0.0
        %1014 = vmatprep.subr.mxu0 0.0
        %1015 = vmatpush1.xpose.msra.mxu0 0.0
        %1016 = vmatprep.subr.mxu0 0.0
        %1017 = vmatpush1.xpose.msra.mxu0 0.0
        %1018 = vmatprep.subr.mxu0 0.0
        %1019 = vmatpush1.xpose.msra.mxu0 0.0
        %1020 = vmatprep.subr.mxu0 0.0
        %1021 = vmatpush1.xpose.msra.mxu0 0.0
        %1022 = vmatprep.subr.mxu0 0.0
        %1023 = vmatpush1.xpose.msra.mxu0 0.0
        %1024 = vmatprep.subr.mxu0 0.0
        %1025 = vmatpush1.xpose.msra.mxu0 0.0
        %1026 = vmatprep.subr.mxu0 0.0
        %1027 = vmatpush1.xpose.msra.mxu0 0.0
        %1028 = vmatprep.subr.mxu0 0.0
        %1029 = vmatpush1.xpose.msra.mxu0 0.0
        %1030 = vmatprep.subr.mxu0 0.0
        %1031 = vmatpush1.xpose.msra.mxu0 0.0
        %1032 = vmatprep.subr.mxu0 0.0
        %1033 = vmatpush1.xpose.msra.mxu0 0.0
        %1034 = vmatprep.subr.mxu0 0.0
        %1035 = vmatpush1.xpose.msra.mxu0 0.0
        %1036 = vmatprep.subr.mxu0 0.0
        %1037 = vmatpush1.xpose.msra.mxu0 0.0
        %1038 = vmatprep.mubr.f32.mxu0 0.0
        %1039 = vmatmul.mubr.f32.gmra.mrb[0].mxu0 %v970
        %v1040 = vpop.f32.mrb[0].mxu0
        %v1041 = vadd.f32 0.0, %v1040
        %v1042 = vpop.f32.mrb[0].mxu0
        %1043 = vdwg.mxu0
        %v1044 = vsub.f32 %v1041, %v712
        %v1045 = vsel %vm631, %v1044, -inf
        %1046 = vmax.xlane.f32.xlu0 %v1045
        %v1047 = vpop.xlane.xlu0 %1046
        %v1048 = vsub.f32 %v1044, %v1047
        %v1049 = vmul.f32 %v1048, 1.442695
        %v1050 = vpow.pop %v1049
        %v1051 = vsel %vm631, %v1050, 0.0
        %1052 = vadd.xlane.f32.xlu0 %v1051
        %v1053 = vpop.xlane.xlu0 %1052
        %v1054 = vrcp.pop %v1053
        %v1055 = vmul.f32 %v1050, %v1054
        %1056 = vrot.lane.b32.xlu0 %v628, 112
        %v1057 = vpop.permute.xlu0 %1056
        %v1060 = vsel %vm631, %v1055, 0
        %1062 = vmatprep.subr.mxu0 0.0
        %1063 = vmatpush1.msra.mxu0 %v1057
        %1064 = vmatprep.subr.mxu0 0.0
        %1065 = vmatpush1.msra.mxu0 0.0
        %1066 = vmatprep.subr.mxu0 0.0
        %1067 = vmatpush1.msra.mxu0 0.0
        %1068 = vmatprep.subr.mxu0 0.0
        %1069 = vmatpush1.msra.mxu0 0.0
        %1070 = vmatprep.subr.mxu0 0.0
        %1071 = vmatpush1.msra.mxu0 0.0
        %1072 = vmatprep.subr.mxu0 0.0
        %1073 = vmatpush1.msra.mxu0 0.0
        %1074 = vmatprep.subr.mxu0 0.0
        %1075 = vmatpush1.msra.mxu0 0.0
        %1076 = vmatprep.subr.mxu0 0.0
        %1077 = vmatpush1.msra.mxu0 0.0
        %1078 = vmatprep.subr.mxu0 0.0
        %1079 = vmatpush1.msra.mxu0 0.0
        %1080 = vmatprep.subr.mxu0 0.0
        %1081 = vmatpush1.msra.mxu0 0.0
        %1082 = vmatprep.subr.mxu0 0.0
        %1083 = vmatpush1.msra.mxu0 0.0
        %1084 = vmatprep.subr.mxu0 0.0
        %1085 = vmatpush1.msra.mxu0 0.0
        %1086 = vmatprep.subr.mxu0 0.0
        %1087 = vmatpush1.msra.mxu0 0.0
        %1088 = vmatprep.subr.mxu0 0.0
        %1089 = vmatpush1.msra.mxu0 0.0
        %1090 = vmatprep.subr.mxu0 0.0
        %1091 = vmatpush1.msra.mxu0 0.0
        %1092 = vmatprep.subr.mxu0 0.0
        %1093 = vmatpush1.msra.mxu0 0.0
        %1094 = vmatprep.subr.mxu0 0.0
        %1095 = vmatpush1.msra.mxu0 0.0
        %1096 = vmatprep.subr.mxu0 0.0
        %1097 = vmatpush1.msra.mxu0 0.0
        %1098 = vmatprep.subr.mxu0 0.0
        %1099 = vmatpush1.msra.mxu0 0.0
        %1100 = vmatprep.subr.mxu0 0.0
        %1101 = vmatpush1.msra.mxu0 0.0
        %1102 = vmatprep.subr.mxu0 0.0
        %1103 = vmatpush1.msra.mxu0 0.0
        %1104 = vmatprep.subr.mxu0 0.0
        %1105 = vmatpush1.msra.mxu0 0.0
        %1106 = vmatprep.subr.mxu0 0.0
        %1107 = vmatpush1.msra.mxu0 0.0
        %1108 = vmatprep.subr.mxu0 0.0
        %1109 = vmatpush1.msra.mxu0 0.0
        %1110 = vmatprep.subr.mxu0 0.0
        %1111 = vmatpush1.msra.mxu0 0.0
        %1112 = vmatprep.subr.mxu0 0.0
        %1113 = vmatpush1.msra.mxu0 0.0
        %1114 = vmatprep.subr.mxu0 0.0
        %1115 = vmatpush1.msra.mxu0 0.0
        %1116 = vmatprep.subr.mxu0 0.0
        %1117 = vmatpush1.msra.mxu0 0.0
        %1118 = vmatprep.subr.mxu0 0.0
        %1119 = vmatpush1.msra.mxu0 0.0
        %1120 = vmatprep.subr.mxu0 0.0
        %1121 = vmatpush1.msra.mxu0 0.0
        %1122 = vmatprep.subr.mxu0 0.0
        %1123 = vmatpush1.msra.mxu0 0.0
        %1124 = vmatprep.subr.mxu0 0.0
        %1125 = vmatpush1.msra.mxu0 0.0
        %1126 = vmatprep.mubr.f32.mxu0 0.0
        %1127 = vmatmul.mubr.f32.gmra.mrb[0].mxu0 %v1060
        %v1128 = vpop.f32.mrb[0].mxu0
        %v1129 = vadd.f32 0.0, %v1128
        %v1130 = vpop.f32.mrb[0].mxu0
        %1131 = vdwg.mxu0
        %1132 = vrot.lane.b32.xlu0 %v468, 104
        %v1133 = vpop.permute.xlu0 %1132
        %1134 = vrot.lane.b32.xlu0 %v547, 104
        %v1135 = vpop.permute.xlu0 %1134
        %v1136 = vsel %vm631, %v1133, 0
        %v1138 = vsel %vm631, %v1135, 0
        %1140 = vmatprep.subr.mxu0 0.0
        %1141 = vmatpush1.xpose.msra.mxu0 %v1138
        %1142 = vmatprep.subr.mxu0 0.0
        %1143 = vmatpush1.xpose.msra.mxu0 0.0
        %1144 = vmatprep.subr.mxu0 0.0
        %1145 = vmatpush1.xpose.msra.mxu0 0.0
        %1146 = vmatprep.subr.mxu0 0.0
        %1147 = vmatpush1.xpose.msra.mxu0 0.0
        %1148 = vmatprep.subr.mxu0 0.0
        %1149 = vmatpush1.xpose.msra.mxu0 0.0
        %1150 = vmatprep.subr.mxu0 0.0
        %1151 = vmatpush1.xpose.msra.mxu0 0.0
        %1152 = vmatprep.subr.mxu0 0.0
        %1153 = vmatpush1.xpose.msra.mxu0 0.0
        %1154 = vmatprep.subr.mxu0 0.0
        %1155 = vmatpush1.xpose.msra.mxu0 0.0
        %1156 = vmatprep.subr.mxu0 0.0
        %1157 = vmatpush1.xpose.msra.mxu0 0.0
        %1158 = vmatprep.subr.mxu0 0.0
        %1159 = vmatpush1.xpose.msra.mxu0 0.0
        %1160 = vmatprep.subr.mxu0 0.0
        %1161 = vmatpush1.xpose.msra.mxu0 0.0
        %1162 = vmatprep.subr.mxu0 0.0
        %1163 = vmatpush1.xpose.msra.mxu0 0.0
        %1164 = vmatprep.subr.mxu0 0.0
        %1165 = vmatpush1.xpose.msra.mxu0 0.0
        %1166 = vmatprep.subr.mxu0 0.0
        %1167 = vmatpush1.xpose.msra.mxu0 0.0
        %1168 = vmatprep.subr.mxu0 0.0
        %1169 = vmatpush1.xpose.msra.mxu0 0.0
        %1170 = vmatprep.subr.mxu0 0.0
        %1171 = vmatpush1.xpose.msra.mxu0 0.0
        %1172 = vmatprep.subr.mxu0 0.0
        %1173 = vmatpush1.xpose.msra.mxu0 0.0
        %1174 = vmatprep.subr.mxu0 0.0
        %1175 = vmatpush1.xpose.msra.mxu0 0.0
        %1176 = vmatprep.subr.mxu0 0.0
        %1177 = vmatpush1.xpose.msra.mxu0 0.0
        %1178 = vmatprep.subr.mxu0 0.0
        %1179 = vmatpush1.xpose.msra.mxu0 0.0
        %1180 = vmatprep.subr.mxu0 0.0
        %1181 = vmatpush1.xpose.msra.mxu0 0.0
        %1182 = vmatprep.subr.mxu0 0.0
        %1183 = vmatpush1.xpose.msra.mxu0 0.0
        %1184 = vmatprep.subr.mxu0 0.0
        %1185 = vmatpush1.xpose.msra.mxu0 0.0
        %1186 = vmatprep.subr.mxu0 0.0
        %1187 = vmatpush1.xpose.msra.mxu0 0.0
        %1188 = vmatprep.subr.mxu0 0.0
        %1189 = vmatpush1.xpose.msra.mxu0 0.0
        %1190 = vmatprep.subr.mxu0 0.0
        %1191 = vmatpush1.xpose.msra.mxu0 0.0
        %1192 = vmatprep.subr.mxu0 0.0
        %1193 = vmatpush1.xpose.msra.mxu0 0.0
        %1194 = vmatprep.subr.mxu0 0.0
        %1195 = vmatpush1.xpose.msra.mxu0 0.0
        %1196 = vmatprep.subr.mxu0 0.0
        %1197 = vmatpush1.xpose.msra.mxu0 0.0
        %1198 = vmatprep.subr.mxu0 0.0
        %1199 = vmatpush1.xpose.msra.mxu0 0.0
        %1200 = vmatprep.subr.mxu0 0.0
        %1201 = vmatpush1.xpose.msra.mxu0 0.0
        %1202 = vmatprep.subr.mxu0 0.0
        %1203 = vmatpush1.xpose.msra.mxu0 0.0
        %1204 = vmatprep.mubr.f32.mxu0 0.0
        %1205 = vmatmul.mubr.f32.gmra.mrb[0].mxu0 %v1136
        %v1206 = vpop.f32.mrb[0].mxu0
        %v1207 = vadd.f32 0.0, %v1206
        %v1208 = vpop.f32.mrb[0].mxu0
        %1209 = vdwg.mxu0
        %v1210 = vsub.f32 %v1207, %v712
        %v1211 = vsel %vm631, %v1210, -inf
        %1212 = vmax.xlane.f32.xlu0 %v1211
        %v1213 = vpop.xlane.xlu0 %1212
        %v1214 = vsub.f32 %v1210, %v1213
        %v1215 = vmul.f32 %v1214, 1.442695
        %v1216 = vpow.pop %v1215
        %v1217 = vsel %vm631, %v1216, 0.0
        %1218 = vadd.xlane.f32.xlu0 %v1217
        %v1219 = vpop.xlane.xlu0 %1218
        %v1220 = vrcp.pop %v1219
        %v1221 = vmul.f32 %v1216, %v1220
        %1222 = vrot.lane.b32.xlu0 %v628, 104
        %v1223 = vpop.permute.xlu0 %1222
        %v1226 = vsel %vm631, %v1221, 0
        %1228 = vmatprep.subr.mxu0 0.0
        %1229 = vmatpush1.msra.mxu0 %v1223
        %1230 = vmatprep.subr.mxu0 0.0
        %1231 = vmatpush1.msra.mxu0 0.0
        %1232 = vmatprep.subr.mxu0 0.0
        %1233 = vmatpush1.msra.mxu0 0.0
        %1234 = vmatprep.subr.mxu0 0.0
        %1235 = vmatpush1.msra.mxu0 0.0
        %1236 = vmatprep.subr.mxu0 0.0
        %1237 = vmatpush1.msra.mxu0 0.0
        %1238 = vmatprep.subr.mxu0 0.0
        %1239 = vmatpush1.msra.mxu0 0.0
        %1240 = vmatprep.subr.mxu0 0.0
        %1241 = vmatpush1.msra.mxu0 0.0
        %1242 = vmatprep.subr.mxu0 0.0
        %1243 = vmatpush1.msra.mxu0 0.0
        %1244 = vmatprep.subr.mxu0 0.0
        %1245 = vmatpush1.msra.mxu0 0.0
        %1246 = vmatprep.subr.mxu0 0.0
        %1247 = vmatpush1.msra.mxu0 0.0
        %1248 = vmatprep.subr.mxu0 0.0
        %1249 = vmatpush1.msra.mxu0 0.0
        %1250 = vmatprep.subr.mxu0 0.0
        %1251 = vmatpush1.msra.mxu0 0.0
        %1252 = vmatprep.subr.mxu0 0.0
        %1253 = vmatpush1.msra.mxu0 0.0
        %1254 = vmatprep.subr.mxu0 0.0
        %1255 = vmatpush1.msra.mxu0 0.0
        %1256 = vmatprep.subr.mxu0 0.0
        %1257 = vmatpush1.msra.mxu0 0.0
        %1258 = vmatprep.subr.mxu0 0.0
        %1259 = vmatpush1.msra.mxu0 0.0
        %1260 = vmatprep.subr.mxu0 0.0
        %1261 = vmatpush1.msra.mxu0 0.0
        %1262 = vmatprep.subr.mxu0 0.0
        %1263 = vmatpush1.msra.mxu0 0.0
        %1264 = vmatprep.subr.mxu0 0.0
        %1265 = vmatpush1.msra.mxu0 0.0
        %1266 = vmatprep.subr.mxu0 0.0
        %1267 = vmatpush1.msra.mxu0 0.0
        %1268 = vmatprep.subr.mxu0 0.0
        %1269 = vmatpush1.msra.mxu0 0.0
        %1270 = vmatprep.subr.mxu0 0.0
        %1271 = vmatpush1.msra.mxu0 0.0
        %1272 = vmatprep.subr.mxu0 0.0
        %1273 = vmatpush1.msra.mxu0 0.0
        %1274 = vmatprep.subr.mxu0 0.0
        %1275 = vmatpush1.msra.mxu0 0.0
        %1276 = vmatprep.subr.mxu0 0.0
        %1277 = vmatpush1.msra.mxu0 0.0
        %1278 = vmatprep.subr.mxu0 0.0
        %1279 = vmatpush1.msra.mxu0 0.0
        %1280 = vmatprep.subr.mxu0 0.0
        %1281 = vmatpush1.msra.mxu0 0.0
        %1282 = vmatprep.subr.mxu0 0.0
        %1283 = vmatpush1.msra.mxu0 0.0
        %1284 = vmatprep.subr.mxu0 0.0
        %1285 = vmatpush1.msra.mxu0 0.0
        %1286 = vmatprep.subr.mxu0 0.0
        %1287 = vmatpush1.msra.mxu0 0.0
        %1288 = vmatprep.subr.mxu0 0.0
        %1289 = vmatpush1.msra.mxu0 0.0
        %1290 = vmatprep.subr.mxu0 0.0
        %1291 = vmatpush1.msra.mxu0 0.0
        %1292 = vmatprep.mubr.f32.mxu0 0.0
        %1293 = vmatmul.mubr.f32.gmra.mrb[0].mxu0 %v1226
        %v1294 = vpop.f32.mrb[0].mxu0
        %v1295 = vadd.f32 0.0, %v1294
        %v1296 = vpop.f32.mrb[0].mxu0
        %1297 = vdwg.mxu0
        %1299 = vrot.lane.b32.xlu0 %v963, 8
        %v1300 = vpop.permute.xlu0 %1299
        %1303 = vrot.lane.b32.xlu0 %v1129, 16
        %v1304 = vpop.permute.xlu0 %1303
        %1307 = vrot.lane.b32.xlu0 %v1295, 24
        %v1308 = vpop.permute.xlu0 %1307
        %v1310 = vsel %vm631, %v796, %v1300
        %vm1311 = vcmask 130048
        %v1312 = vsel %vm1311, %v1310, %v1304
        %vm1313 = vcmask 195584
        %v1314 = vsel %vm1313, %v1312, %v1308
        %1315 = vst.msk [vmem:[%s375] sm:$0xff] %vm394, %v1314
        %s1316 = sand.u32 %s213, 1
        %s1317 = scalar_lea.sflag [#allocation4], %s1316
        %s1318 = sand.u32 %s213, 1
        %s1319 = smul.addr %s1318, 8
        %s1320 = scalar_lea.vmem [#allocation10], %s1319
        // Predicated region
        $region69: #{tpu_custom_call.1} parent=51 // pred_check
          %p1321 = pneg %p223
        $region70: #{tpu_custom_call.1} parent=51 // pred_check_branch
          %1323 = sbr.rel (%p1321) target = $region72
        $region71: #{tpu_custom_call.1} parent=51 // pred_region
          %s1325 = ssub.s32 128, 128
          %1326 = vsyncadd %s1317, %s1325
          %s1327 = smul.addr %s27, 128
          %s1328 = scalar_lea.hbm %s8, %s1327
          %s1330 = sshll.u32 %s1320, 4
          %s1331 = int_to_ptr.vmem [resolvable:$true] %s1330
          %1333 = dma.vmem_to_hbm [thread:$0]  %s1331, 128, %s1328, %s1317
        $region72: #{tpu_custom_call.1} parent=51 // pred_fallthru
          _
      $region52: #{tpu_custom_call.1} parent=5 // pred_fallthru
        _
      %p1334 = scmp.le.s32.totalorder 2, %s22
      // Predicated region
      $region73: #{tpu_custom_call.1} parent=5 // pred_check
        %p1335 = pneg %p1334
      $region74: #{tpu_custom_call.1} parent=5 // pred_check_branch
        %1337 = sbr.rel (%p1335) target = $region76
      $region75: #{tpu_custom_call.1} parent=5 // pred_region
        %s1338 = ssub.s32 %s22, 2
        // Predicated region
        $region77: #{tpu_custom_call.1} parent=75 // pred_check
          %p1339 = pneg %p229
        $region78: #{tpu_custom_call.1} parent=75 // pred_check_branch
          %1341 = sbr.rel (%p1339) target = $region80
        $region79: #{tpu_custom_call.1} parent=75 // pred_region
          %s1342 = sand.u32 %s214, 1
          %s1343 = scalar_lea.sflag [#allocation4], %s1342
          %s1344 = sand.u32 %s214, 1
          %s1345 = smul.addr %s1344, 8
          %s1346 = scalar_lea.vmem [#allocation10], %s1345
          %1347 = dma.done %s1343, 128
        $region80: #{tpu_custom_call.1} parent=75 // pred_fallthru
          _
      $region76: #{tpu_custom_call.1} parent=5 // pred_fallthru
        _
    $region6: #{tpu_custom_call.1} parent=1 // loop_footer
      %s26 = sadd.s32 1, %s22
    $region7: #{tpu_custom_call.1} parent=1 // loop_footer_branch
      %21 = sbr.rel target = $region3
    $region8: #{tpu_custom_call.1} parent=1 // loop_exit
      _
    %1348 = vsyncpa [#allocation3], 1
    %s1349 = scalar_lea.sflag [#allocation3], 1
    %1350 = vsyncpa %s1349, 1
    %1351 = vsyncpa [#allocation6], 1
    %1352 = vsyncpa [#allocation9], 1
    %1353 = vsyncpa [#allocation4], 1
    %s1354 = scalar_lea.sflag [#allocation4], 1
    %1355 = vsyncpa %s1354, 1

</llo_original>
